<compile_context>
chip_gen: v7x
topology: tpu7x:2x2x1
jax: 0.10.0
libtpu: 0.0.40
codegen_flags: <defaults>
</compile_context>

<pallas_src>
import functools

import jax
import jax.numpy as jnp
from jax.experimental import pallas as pl
from jax.experimental.pallas import tpu as pltpu

EPS = 1e-5
H1 = 128                 # conv1 out channels
H2 = 64                  # conv2 out channels
MXU_DTYPE = jnp.bfloat16  # matmul-operand dtype (f32 accumulation everywhere)


def _pointnet_xs_kernel(x_ref, w1t_ref, c1_ref, w2at_ref, w2bt_ref, c2_ref,
                        w3t_ref, b3_ref, o_ref, *, bt, pts, cin):
    rows = bt * pts
    x = x_ref[...]                                            # (rows, cin) f32

    # conv1 (1x1, no bias) + folded BN1.  Cin is tiny, so do it on the VPU as
    # unrolled broadcast-FMAs in f32; fall back to the MXU for wide inputs.
    if cin <= 8:
        h1 = c1_ref[...] + x[:, 0:1] * w1t_ref[0:1, :]        # (rows, 128)
        for c in range(1, cin):                               # static unroll
            h1 = h1 + x[:, c:c + 1] * w1t_ref[c:c + 1, :]
    else:
        h1 = jnp.dot(x, w1t_ref[...],
                     preferred_element_type=jnp.float32) + c1_ref[...]

    # per-batch max over points -> one global-feature row per batch (XLU reduce).
    g = jnp.max(h1.reshape(bt, pts, H1), axis=1)              # (bt, 128) f32

    # conv2 (1x1, no bias) + folded BN2, split into local + global matmuls
    # (equivalent to concat([h1, g_expanded]) @ w2 without concat/broadcast).
    # BN2 bias is folded into the tiny per-batch global term.
    gg = jnp.dot(g.astype(w2bt_ref.dtype), w2bt_ref[...],
                 preferred_element_type=jnp.float32) + c2_ref[...]     # (bt, 64)
    h2 = jnp.dot(h1.astype(w2at_ref.dtype), w2at_ref[...],
                 preferred_element_type=jnp.float32)                   # (rows, 64)
    h2 = jnp.maximum(h2.reshape(bt, pts, H2) + gg[:, None, :], 0.0)    # + ReLU

    # conv3 (1x1, with bias): store the true k lanes (no padding, no re-slice).
    out = jnp.dot(h2.reshape(rows, H2).astype(w3t_ref.dtype), w3t_ref[...],
                  preferred_element_type=jnp.float32) + b3_ref[...]    # (rows, k)
    o_ref[...] = out.astype(o_ref.dtype)


def prepare_params(w1, s1, c1, w2, s2, c2, w3, b3):
    """One-time weight prep (hoisted out of the per-call forward):
    transpose, fold eval-mode BN scales, cast MXU operands to bf16."""
    w1t = (w1.T * s1).astype(jnp.float32)       # (Cin,128); conv1 runs on VPU -> f32
    c1f = c1.reshape(1, H1).astype(jnp.float32)
    w2a, w2b = w2[:, :H1], w2[:, H1:]           # split conv2's 256 input channels
    w2at = (w2a.T * s2).astype(MXU_DTYPE)       # (128, 64), BN2-scaled, local half
    w2bt = (w2b.T * s2).astype(MXU_DTYPE)       # (128, 64), BN2-scaled, global half
    c2f = c2.reshape(1, H2).astype(jnp.float32)
    w3t = w3.T.astype(MXU_DTYPE)                # (64, k), unpadded
    b3f = b3.reshape(1, -1).astype(jnp.float32)  # (1, k)
    return (w1t, c1f, w2at, w2bt, c2f, w3t, b3f)


@functools.partial(jax.jit, static_argnames=("batch_tile",))
def pointnet_xs_forward(x, prepped, *, batch_tile=1):
    w1t, c1f, w2at, w2bt, c2f, w3t, b3f = prepped
    B, P, Cin = x.shape
    k = w3t.shape[1]
    bt = batch_tile
    assert B % bt == 0, "B must be divisible by batch_tile"
    rows = bt * P

    xin = x.reshape(B * P, Cin).astype(jnp.float32)   # flatten batch-sorted points

    full = lambda shape: pl.BlockSpec(shape, lambda b: (0,) * len(shape))
    kernel = functools.partial(_pointnet_xs_kernel, bt=bt, pts=P, cin=Cin)

    out = pl.pallas_call(
        kernel,
        out_shape=jax.ShapeDtypeStruct((B * P, k), jnp.float32),
        grid_spec=pl.GridSpec(
            grid=(B // bt,),
            in_specs=[
                pl.BlockSpec((rows, Cin), lambda b: (b, 0)),  # x: bt batches/step
                full((Cin, H1)),     # w1t  (BN1-scale-folded, f32)
                full((1, H1)),       # bn1 bias
                full((H1, H2)),      # w2at (BN2-scale-folded, bf16, local half)
                full((H1, H2)),      # w2bt (BN2-scale-folded, bf16, global half)
                full((1, H2)),       # bn2 bias
                full((H2, k)),       # w3t  (bf16, unpadded)
                full((1, k)),        # b3
            ],
            out_specs=pl.BlockSpec((rows, k), lambda b: (b, 0)),
        ),
        compiler_params=pltpu.CompilerParams(
            dimension_semantics=("parallel",)),
    )(xin, w1t, c1f, w2at, w2bt, c2f, w3t, b3f)

    return out.reshape(B, P, k)


def _reference(x, w1, s1, c1, w2, s2, c2, w3, b3):
    # pure-JAX f32 reference mirroring the PyTorch forward (eval-mode BN folded)
    h1 = jnp.einsum("bpc,oc->bpo", x, w1) * s1 + c1            # conv1 + bn1
    g = jnp.max(h1, axis=1, keepdims=True)                     # per-batch max
    cat = jnp.concatenate([h1, jnp.broadcast_to(g, h1.shape)], axis=-1)
    h2 = jnp.maximum(jnp.einsum("bpc,oc->bpo", cat, w2) * s2 + c2, 0.0)
    return jnp.einsum("bpc,oc->bpo", h2, w3) + b3              # conv3 (+bias)


def init_params(key, in_channels, out_channels):
    ks = jax.random.split(key, 12)
    # Conv1d weights (out, in, 1) -> stored as (out, in)
    w1 = 0.1 * jax.random.normal(ks[0], (H1, in_channels), jnp.float32)
    w2 = 0.1 * jax.random.normal(ks[1], (H2, 2 * H1), jnp.float32)
    w3 = 0.1 * jax.random.normal(ks[2], (out_channels, H2), jnp.float32)
    b3 = 0.1 * jax.random.normal(ks[3], (1, out_channels), jnp.float32)

    def bn(kg, kb, km, kv, c):
        gamma = 1.0 + 0.1 * jax.random.normal(kg, (c,), jnp.float32)
        beta = 0.1 * jax.random.normal(kb, (c,), jnp.float32)
        mean = 0.1 * jax.random.normal(km, (c,), jnp.float32)
        var = jax.random.uniform(kv, (c,), jnp.float32, 0.5, 1.5)
        scale = gamma / jnp.sqrt(var + EPS)
        bias = beta - mean * scale
        return scale.reshape(1, c), bias.reshape(1, c)

    s1, c1 = bn(ks[4], ks[5], ks[6], ks[7], H1)
    s2, c2 = bn(ks[8], ks[9], ks[10], ks[11], H2)
    return w1, s1, c1, w2, s2, c2, w3, b3


if __name__ == "__main__":
    in_channels = 4
    out_channels = 16
    B, P = 16, 128           # 16 batches x 128 points; batch_tile=2 -> grid=(8,)

    key = jax.random.PRNGKey(0)
    kx, kp = jax.random.split(key)
    x = jax.random.normal(kx, (B, P, in_channels), jnp.float32)
    params = init_params(kp, in_channels, out_channels)

    prepped = prepare_params(*params)          # one-time prep, off the hot path
    out = pointnet_xs_forward(x, prepped, batch_tile=2)
    out = jax.block_until_ready(out)

    ref = _reference(x, *params)
    assert out.shape == (B, P, out_channels)
    # bf16 matmul operands (f32 accumulation) -> relaxed tolerance vs f32 reference.
    assert jnp.allclose(out, ref, atol=5e-2, rtol=5e-2), "mismatch vs reference"

    print("KERNEL_OK")
</pallas_src>

<mosaic_0001>
module attributes {stable_mosaic.version = 11 : i64} {
  func.func @_pointnet_xs_kernel(%arg0: i32, %arg1: memref<256x4xf32, #tpu.memory_space<vmem>>, %arg2: memref<4x128xf32, #tpu.memory_space<vmem>>, %arg3: memref<1x128xf32, #tpu.memory_space<vmem>>, %arg4: memref<128x64xbf16, #tpu.memory_space<vmem>>, %arg5: memref<128x64xbf16, #tpu.memory_space<vmem>>, %arg6: memref<1x64xf32, #tpu.memory_space<vmem>>, %arg7: memref<64x16xbf16, #tpu.memory_space<vmem>>, %arg8: memref<1x16xf32, #tpu.memory_space<vmem>>, %arg9: memref<256x16xf32, #tpu.memory_space<vmem>>) attributes {dimension_semantics = [#tpu.dimension_semantics<parallel>], iteration_bounds = array<i64: 8>, scalar_prefetch = 0 : i64, scratch_operands = 0 : i64, tpu.core_type = #tpu.core_type<tc>, window_params = [{transform_indices = @transform_0, window_bounds = array<i64: 256, 4>}, {pipeline_mode = #tpu.pipeline_mode<synchronous>, transform_indices = @transform_1, window_bounds = array<i64: 4, 128>}, {pipeline_mode = #tpu.pipeline_mode<synchronous>, transform_indices = @transform_2, window_bounds = array<i64: 1, 128>}, {pipeline_mode = #tpu.pipeline_mode<synchronous>, transform_indices = @transform_3, window_bounds = array<i64: 128, 64>}, {pipeline_mode = #tpu.pipeline_mode<synchronous>, transform_indices = @transform_4, window_bounds = array<i64: 128, 64>}, {pipeline_mode = #tpu.pipeline_mode<synchronous>, transform_indices = @transform_5, window_bounds = array<i64: 1, 64>}, {pipeline_mode = #tpu.pipeline_mode<synchronous>, transform_indices = @transform_6, window_bounds = array<i64: 64, 16>}, {pipeline_mode = #tpu.pipeline_mode<synchronous>, transform_indices = @transform_7, window_bounds = array<i64: 1, 16>}, {transform_indices = @transform_8, window_bounds = array<i64: 256, 16>}]} {
    %c0 = arith.constant 0 : index
    %c0_0 = arith.constant 0 : index
    %0 = vector.load %arg1[%c0, %c0_0] : memref<256x4xf32, #tpu.memory_space<vmem>>, vector<256x4xf32>
    %c0_1 = arith.constant 0 : index
    %c0_2 = arith.constant 0 : index
    %1 = vector.load %arg3[%c0_1, %c0_2] : memref<1x128xf32, #tpu.memory_space<vmem>>, vector<1x128xf32>
    %2 = vector.extract_strided_slice %0 {offsets = [0, 0], sizes = [256, 1], strides = [1, 1]} : vector<256x4xf32> to vector<256x1xf32>
    %c0_3 = arith.constant 0 : index
    %c0_4 = arith.constant 0 : index
    %3 = vector.load %arg2[%c0_3, %c0_4] : memref<4x128xf32, #tpu.memory_space<vmem>>, vector<1x128xf32>
    %4 = vector.broadcast %2 : vector<256x1xf32> to vector<256x128xf32>
    %5 = vector.broadcast %3 : vector<1x128xf32> to vector<256x128xf32>
    %6 = arith.mulf %4, %5 : vector<256x128xf32>
    %7 = vector.broadcast %1 : vector<1x128xf32> to vector<256x128xf32>
    %8 = arith.addf %7, %6 : vector<256x128xf32>
    %9 = vector.extract_strided_slice %0 {offsets = [0, 1], sizes = [256, 1], strides = [1, 1]} : vector<256x4xf32> to vector<256x1xf32>
    %c1 = arith.constant 1 : index
    %c0_5 = arith.constant 0 : index
    %10 = vector.load %arg2[%c1, %c0_5] : memref<4x128xf32, #tpu.memory_space<vmem>>, vector<1x128xf32>
    %11 = vector.broadcast %9 : vector<256x1xf32> to vector<256x128xf32>
    %12 = vector.broadcast %10 : vector<1x128xf32> to vector<256x128xf32>
    %13 = arith.mulf %11, %12 : vector<256x128xf32>
    %14 = arith.addf %8, %13 : vector<256x128xf32>
    %15 = vector.extract_strided_slice %0 {offsets = [0, 2], sizes = [256, 1], strides = [1, 1]} : vector<256x4xf32> to vector<256x1xf32>
    %c2 = arith.constant 2 : index
    %c0_6 = arith.constant 0 : index
    %16 = vector.load %arg2[%c2, %c0_6] : memref<4x128xf32, #tpu.memory_space<vmem>>, vector<1x128xf32>
    %17 = vector.broadcast %15 : vector<256x1xf32> to vector<256x128xf32>
    %18 = vector.broadcast %16 : vector<1x128xf32> to vector<256x128xf32>
    %19 = arith.mulf %17, %18 : vector<256x128xf32>
    %20 = arith.addf %14, %19 : vector<256x128xf32>
    %21 = vector.extract_strided_slice %0 {offsets = [0, 3], sizes = [256, 1], strides = [1, 1]} : vector<256x4xf32> to vector<256x1xf32>
    %c3 = arith.constant 3 : index
    %c0_7 = arith.constant 0 : index
    %22 = vector.load %arg2[%c3, %c0_7] : memref<4x128xf32, #tpu.memory_space<vmem>>, vector<1x128xf32>
    %23 = vector.broadcast %21 : vector<256x1xf32> to vector<256x128xf32>
    %24 = vector.broadcast %22 : vector<1x128xf32> to vector<256x128xf32>
    %25 = arith.mulf %23, %24 : vector<256x128xf32>
    %26 = arith.addf %20, %25 : vector<256x128xf32>
    %27 = vector.shape_cast %26 : vector<256x128xf32> to vector<2x128x128xf32>
    %cst = arith.constant dense<0xFF800000> : vector<2x128xf32>
    %28 = vector.multi_reduction <maximumf>, %27, %cst [1] : vector<2x128x128xf32> to vector<2x128xf32>
    %29 = arith.truncf %28 : vector<2x128xf32> to vector<2x128xbf16>
    %c0_8 = arith.constant 0 : index
    %c0_9 = arith.constant 0 : index
    %30 = vector.load %arg5[%c0_8, %c0_9] : memref<128x64xbf16, #tpu.memory_space<vmem>>, vector<128x64xbf16>
    %cst_10 = arith.constant dense<0.000000e+00> : vector<2x64xf32>
    %31 = tpu.matmul %29, %30, %cst_10 {dimension_numbers = #tpu.dot_dimension_numbers<[1], [0], [0], [1], [0, 0, 1, 1], [], []>} : vector<2x128xbf16>, vector<128x64xbf16>, vector<2x64xf32> -> vector<2x64xf32>
    %c0_11 = arith.constant 0 : index
    %c0_12 = arith.constant 0 : index
    %32 = vector.load %arg6[%c0_11, %c0_12] : memref<1x64xf32, #tpu.memory_space<vmem>>, vector<1x64xf32>
    %33 = vector.broadcast %32 : vector<1x64xf32> to vector<2x64xf32>
    %34 = arith.addf %31, %33 : vector<2x64xf32>
    %35 = arith.truncf %26 : vector<256x128xf32> to vector<256x128xbf16>
    %c0_13 = arith.constant 0 : index
    %c0_14 = arith.constant 0 : index
    %36 = vector.load %arg4[%c0_13, %c0_14] : memref<128x64xbf16, #tpu.memory_space<vmem>>, vector<128x64xbf16>
    %cst_15 = arith.constant dense<0.000000e+00> : vector<256x64xf32>
    %37 = tpu.matmul %35, %36, %cst_15 {dimension_numbers = #tpu.dot_dimension_numbers<[1], [0], [0], [1], [0, 0, 1, 1], [], []>} : vector<256x128xbf16>, vector<128x64xbf16>, vector<256x64xf32> -> vector<256x64xf32>
    %38 = vector.shape_cast %37 : vector<256x64xf32> to vector<2x128x64xf32>
    %39 = vector.shape_cast %34 : vector<2x64xf32> to vector<2x1x64xf32>
    %40 = vector.broadcast %39 : vector<2x1x64xf32> to vector<2x128x64xf32>
    %41 = arith.addf %38, %40 : vector<2x128x64xf32>
    %cst_16 = arith.constant 0.000000e+00 : f32
    %42 = vector.broadcast %cst_16 : f32 to vector<2x128x64xf32>
    %43 = arith.maximumf %41, %42 : vector<2x128x64xf32>
    %44 = vector.shape_cast %43 : vector<2x128x64xf32> to vector<256x64xf32>
    %45 = arith.truncf %44 : vector<256x64xf32> to vector<256x64xbf16>
    %c0_17 = arith.constant 0 : index
    %c0_18 = arith.constant 0 : index
    %46 = vector.load %arg7[%c0_17, %c0_18] : memref<64x16xbf16, #tpu.memory_space<vmem>>, vector<64x16xbf16>
    %cst_19 = arith.constant dense<0.000000e+00> : vector<256x16xf32>
    %47 = tpu.matmul %45, %46, %cst_19 {dimension_numbers = #tpu.dot_dimension_numbers<[1], [0], [0], [1], [0, 0, 1, 1], [], []>} : vector<256x64xbf16>, vector<64x16xbf16>, vector<256x16xf32> -> vector<256x16xf32>
    %c0_20 = arith.constant 0 : index
    %c0_21 = arith.constant 0 : index
    %48 = vector.load %arg8[%c0_20, %c0_21] : memref<1x16xf32, #tpu.memory_space<vmem>>, vector<1x16xf32>
    %49 = vector.broadcast %48 : vector<1x16xf32> to vector<256x16xf32>
    %50 = arith.addf %47, %49 : vector<256x16xf32>
    %c0_22 = arith.constant 0 : index
    %c0_23 = arith.constant 0 : index
    %51 = vector.load %arg9[%c0_22, %c0_23] : memref<256x16xf32, #tpu.memory_space<vmem>>, vector<256x16xf32>
    tpu.vector_store %arg9[%c0_22, %c0_23], %50 {strides = array<i32>} : memref<256x16xf32, #tpu.memory_space<vmem>>, vector<256x16xf32>,
    return
  }
  func.func @transform_0(%arg0: i32) -> (i32, i32) {
    %c0_i32 = arith.constant 0 : i32
    %c0_i32_0 = arith.constant 0 : i32
    return %arg0, %c0_i32 : i32, i32
  }
  func.func @transform_1(%arg0: i32) -> (i32, i32) {
    %c0_i32 = arith.constant 0 : i32
    %c0_i32_0 = arith.constant 0 : i32
    %c0_i32_1 = arith.constant 0 : i32
    return %c0_i32, %c0_i32_0 : i32, i32
  }
  func.func @transform_2(%arg0: i32) -> (i32, i32) {
    %c0_i32 = arith.constant 0 : i32
    %c0_i32_0 = arith.constant 0 : i32
    %c0_i32_1 = arith.constant 0 : i32
    return %c0_i32, %c0_i32_0 : i32, i32
  }
  func.func @transform_3(%arg0: i32) -> (i32, i32) {
    %c0_i32 = arith.constant 0 : i32
    %c0_i32_0 = arith.constant 0 : i32
    %c0_i32_1 = arith.constant 0 : i32
    return %c0_i32, %c0_i32_0 : i32, i32
  }
  func.func @transform_4(%arg0: i32) -> (i32, i32) {
    %c0_i32 = arith.constant 0 : i32
    %c0_i32_0 = arith.constant 0 : i32
    %c0_i32_1 = arith.constant 0 : i32
    return %c0_i32, %c0_i32_0 : i32, i32
  }
  func.func @transform_5(%arg0: i32) -> (i32, i32) {
    %c0_i32 = arith.constant 0 : i32
    %c0_i32_0 = arith.constant 0 : i32
    %c0_i32_1 = arith.constant 0 : i32
    return %c0_i32, %c0_i32_0 : i32, i32
  }
  func.func @transform_6(%arg0: i32) -> (i32, i32) {
    %c0_i32 = arith.constant 0 : i32
    %c0_i32_0 = arith.constant 0 : i32
    %c0_i32_1 = arith.constant 0 : i32
    return %c0_i32, %c0_i32_0 : i32, i32
  }
  func.func @transform_7(%arg0: i32) -> (i32, i32) {
    %c0_i32 = arith.constant 0 : i32
    %c0_i32_0 = arith.constant 0 : i32
    %c0_i32_1 = arith.constant 0 : i32
    return %c0_i32, %c0_i32_0 : i32, i32
  }
  func.func @transform_8(%arg0: i32) -> (i32, i32) {
    %c0_i32 = arith.constant 0 : i32
    %c0_i32_0 = arith.constant 0 : i32
    return %arg0, %c0_i32 : i32, i32
  }
}

</mosaic_0001>

<llo_original>
// kernel: pointnet_xs_forward.1
$region0: #{pointnet_xs_forward.1}
  #allocation0 [shape = 'u32[]', space=smem, size = 0x4, offset = 0x4, fixed_abs, tag = 'smem constant byte address 0x4 - core index']
  #allocation1 [shape = 'u32[144,128]{1,0:T(1,128)}', space=vmem, size = 0x12000, scoped, tag = 'internal scratch']
  %s0 = inlined_call_operand.vmem [shape: f32[2048,4], index: 0, kind: input, shape index: {}]
  %s1 = inlined_call_operand.vmem [shape: f32[4,128], index: 1, kind: input, shape index: {}]
  %s2 = inlined_call_operand.vmem [shape: f32[1,128], index: 2, kind: input, shape index: {}]
  %s3 = inlined_call_operand.vmem [shape: bf16[128,64], index: 3, kind: input, shape index: {}]
  %s4 = inlined_call_operand.vmem [shape: bf16[128,64], index: 4, kind: input, shape index: {}]
  %s5 = inlined_call_operand.vmem [shape: f32[1,64], index: 5, kind: input, shape index: {}]
  %s6 = inlined_call_operand.vmem [shape: bf16[64,16], index: 6, kind: input, shape index: {}]
  %s7 = inlined_call_operand.vmem [shape: f32[1,16], index: 7, kind: input, shape index: {}]
  %s8 = inlined_call_operand.vmem [shape: f32[2048,16], index: 8, kind: output, shape index: {}]
  %s9 = sld [smem:[#allocation0]]
  $region65: #{pointnet_xs_forward.1} parent=0
    _
  %s11 = ssub.s32 1, %s9
  %s12 = scalar_select 0, %s11, %s9
  loop: start=0, step=1, limit=10
  $region2: #{pointnet_xs_forward.1} parent=0 // loop_pre_header
    _
  $region3: #{pointnet_xs_forward.1} parent=0 // loop_header
    %s14 = sphi 0, %s18
    %p15 = scmp.ge.s32.totalorder %s14, 10
    %s24 = sphi 0, %s26
    %s27 = sphi 0, %s24
    %s28 = sphi 0, %s27
    %s44 = sphi 0, %s28
    %s48 = sphi 0, %s48
    %s50 = sphi 0, %s48
    %s51 = sphi 0, %s50
    %s65 = sphi 0, %s51
    %s69 = sphi 0, %s69
    %s71 = sphi 0, %s69
    %s72 = sphi 0, %s71
    %s86 = sphi 0, %s72
    %s90 = sphi 0, %s90
    %s92 = sphi 0, %s90
    %s93 = sphi 0, %s92
    %s107 = sphi 0, %s93
    %s111 = sphi 0, %s111
    %s113 = sphi 0, %s111
    %s114 = sphi 0, %s113
    %s128 = sphi 0, %s114
    %s132 = sphi 0, %s132
    %s134 = sphi 0, %s132
    %s135 = sphi 0, %s134
    %s149 = sphi 0, %s135
    %s153 = sphi 0, %s153
    %s155 = sphi 0, %s153
    %s156 = sphi 0, %s155
    %s170 = sphi 0, %s156
    %s174 = sphi 0, %s174
    %s176 = sphi 0, %s174
    %s177 = sphi 0, %s176
    %s191 = sphi 0, %s177
    %s197 = sphi 0, %s199
    %s200 = sphi 0, %s197
    %s201 = sphi 0, %s200
    %s217 = sphi 0, %s201
  $region4: #{pointnet_xs_forward.1} parent=0 // loop_header_branch
    %17 = sbr.rel (%p15) target = $region8
  $region5: #{pointnet_xs_forward.1} parent=0 // loop_body
    %s19 = ssub.s32 %s14, 1
    %s20 = ssub.s32 %s14, 2
    %s21 = sadd.s32 %s14, 1
    %s22 = ssub.s32 %s14, %s21
    %p23 = scmp.eq.s32.totalorder %s22, 0
    %s25 = sadd.s32 %s24, 1
    %s26 = scalar_select %p23, %s24, %s25
    %p29 = pneg %p23
    %p30 = scmp.eq.s32.totalorder %s14, 7
    %p31 = por %p29, %p30
    %p32 = scmp.ne.s32.totalorder %s24, %s27
    %p33 = scmp.eq.s32.totalorder %s14, 0
    %p34 = por %p32, %p33
    %p35 = scmp.ne.s32.totalorder %s24, %s27
    %p36 = scmp.eq.s32.totalorder %s19, 7
    %p37 = por %p35, %p36
    %p38 = scmp.ne.s32.totalorder %s27, %s28
    %p39 = scmp.eq.s32.totalorder %s19, 0
    %p40 = por %p38, %p39
    %p41 = scmp.ne.s32.totalorder %s27, %s28
    %p42 = scmp.eq.s32.totalorder %s20, 7
    %p43 = por %p41, %p42
    %p45 = scmp.ne.s32.totalorder %s28, %s44
    %p46 = scmp.eq.s32.totalorder %s20, 0
    %p47 = por %p45, %p46
    %s49 = sadd.s32 %s48, 1
    %p52 = scmp.eq.s32.totalorder %s14, 7
    %p53 = scmp.ne.s32.totalorder %s48, %s50
    %p54 = scmp.eq.s32.totalorder %s14, 0
    %p55 = por %p53, %p54
    %p56 = scmp.ne.s32.totalorder %s48, %s50
    %p57 = scmp.eq.s32.totalorder %s19, 7
    %p58 = por %p56, %p57
    %p59 = scmp.ne.s32.totalorder %s50, %s51
    %p60 = scmp.eq.s32.totalorder %s19, 0
    %p61 = por %p59, %p60
    %p62 = scmp.ne.s32.totalorder %s50, %s51
    %p63 = scmp.eq.s32.totalorder %s20, 7
    %p64 = por %p62, %p63
    %p66 = scmp.ne.s32.totalorder %s51, %s65
    %p67 = scmp.eq.s32.totalorder %s20, 0
    %p68 = por %p66, %p67
    %s70 = sadd.s32 %s69, 1
    %p73 = scmp.eq.s32.totalorder %s14, 7
    %p74 = scmp.ne.s32.totalorder %s69, %s71
    %p75 = scmp.eq.s32.totalorder %s14, 0
    %p76 = por %p74, %p75
    %p77 = scmp.ne.s32.totalorder %s69, %s71
    %p78 = scmp.eq.s32.totalorder %s19, 7
    %p79 = por %p77, %p78
    %p80 = scmp.ne.s32.totalorder %s71, %s72
    %p81 = scmp.eq.s32.totalorder %s19, 0
    %p82 = por %p80, %p81
    %p83 = scmp.ne.s32.totalorder %s71, %s72
    %p84 = scmp.eq.s32.totalorder %s20, 7
    %p85 = por %p83, %p84
    %p87 = scmp.ne.s32.totalorder %s72, %s86
    %p88 = scmp.eq.s32.totalorder %s20, 0
    %p89 = por %p87, %p88
    %s91 = sadd.s32 %s90, 1
    %p94 = scmp.eq.s32.totalorder %s14, 7
    %p95 = scmp.ne.s32.totalorder %s90, %s92
    %p96 = scmp.eq.s32.totalorder %s14, 0
    %p97 = por %p95, %p96
    %p98 = scmp.ne.s32.totalorder %s90, %s92
    %p99 = scmp.eq.s32.totalorder %s19, 7
    %p100 = por %p98, %p99
    %p101 = scmp.ne.s32.totalorder %s92, %s93
    %p102 = scmp.eq.s32.totalorder %s19, 0
    %p103 = por %p101, %p102
    %p104 = scmp.ne.s32.totalorder %s92, %s93
    %p105 = scmp.eq.s32.totalorder %s20, 7
    %p106 = por %p104, %p105
    %p108 = scmp.ne.s32.totalorder %s93, %s107
    %p109 = scmp.eq.s32.totalorder %s20, 0
    %p110 = por %p108, %p109
    %s112 = sadd.s32 %s111, 1
    %p115 = scmp.eq.s32.totalorder %s14, 7
    %p116 = scmp.ne.s32.totalorder %s111, %s113
    %p117 = scmp.eq.s32.totalorder %s14, 0
    %p118 = por %p116, %p117
    %p119 = scmp.ne.s32.totalorder %s111, %s113
    %p120 = scmp.eq.s32.totalorder %s19, 7
    %p121 = por %p119, %p120
    %p122 = scmp.ne.s32.totalorder %s113, %s114
    %p123 = scmp.eq.s32.totalorder %s19, 0
    %p124 = por %p122, %p123
    %p125 = scmp.ne.s32.totalorder %s113, %s114
    %p126 = scmp.eq.s32.totalorder %s20, 7
    %p127 = por %p125, %p126
    %p129 = scmp.ne.s32.totalorder %s114, %s128
    %p130 = scmp.eq.s32.totalorder %s20, 0
    %p131 = por %p129, %p130
    %s133 = sadd.s32 %s132, 1
    %p136 = scmp.eq.s32.totalorder %s14, 7
    %p137 = scmp.ne.s32.totalorder %s132, %s134
    %p138 = scmp.eq.s32.totalorder %s14, 0
    %p139 = por %p137, %p138
    %p140 = scmp.ne.s32.totalorder %s132, %s134
    %p141 = scmp.eq.s32.totalorder %s19, 7
    %p142 = por %p140, %p141
    %p143 = scmp.ne.s32.totalorder %s134, %s135
    %p144 = scmp.eq.s32.totalorder %s19, 0
    %p145 = por %p143, %p144
    %p146 = scmp.ne.s32.totalorder %s134, %s135
    %p147 = scmp.eq.s32.totalorder %s20, 7
    %p148 = por %p146, %p147
    %p150 = scmp.ne.s32.totalorder %s135, %s149
    %p151 = scmp.eq.s32.totalorder %s20, 0
    %p152 = por %p150, %p151
    %s154 = sadd.s32 %s153, 1
    %p157 = scmp.eq.s32.totalorder %s14, 7
    %p158 = scmp.ne.s32.totalorder %s153, %s155
    %p159 = scmp.eq.s32.totalorder %s14, 0
    %p160 = por %p158, %p159
    %p161 = scmp.ne.s32.totalorder %s153, %s155
    %p162 = scmp.eq.s32.totalorder %s19, 7
    %p163 = por %p161, %p162
    %p164 = scmp.ne.s32.totalorder %s155, %s156
    %p165 = scmp.eq.s32.totalorder %s19, 0
    %p166 = por %p164, %p165
    %p167 = scmp.ne.s32.totalorder %s155, %s156
    %p168 = scmp.eq.s32.totalorder %s20, 7
    %p169 = por %p167, %p168
    %p171 = scmp.ne.s32.totalorder %s156, %s170
    %p172 = scmp.eq.s32.totalorder %s20, 0
    %p173 = por %p171, %p172
    %s175 = sadd.s32 %s174, 1
    %p178 = scmp.eq.s32.totalorder %s14, 7
    %p179 = scmp.ne.s32.totalorder %s174, %s176
    %p180 = scmp.eq.s32.totalorder %s14, 0
    %p181 = por %p179, %p180
    %p182 = scmp.ne.s32.totalorder %s174, %s176
    %p183 = scmp.eq.s32.totalorder %s19, 7
    %p184 = por %p182, %p183
    %p185 = scmp.ne.s32.totalorder %s176, %s177
    %p186 = scmp.eq.s32.totalorder %s19, 0
    %p187 = por %p185, %p186
    %p188 = scmp.ne.s32.totalorder %s176, %s177
    %p189 = scmp.eq.s32.totalorder %s20, 7
    %p190 = por %p188, %p189
    %p192 = scmp.ne.s32.totalorder %s177, %s191
    %p193 = scmp.eq.s32.totalorder %s20, 0
    %p194 = por %p192, %p193
    %s195 = ssub.s32 %s14, %s21
    %p196 = scmp.eq.s32.totalorder %s195, 0
    %s198 = sadd.s32 %s197, 1
    %s199 = scalar_select %p196, %s197, %s198
    %p202 = pneg %p196
    %p203 = scmp.eq.s32.totalorder %s14, 7
    %p204 = por %p202, %p203
    %p205 = scmp.ne.s32.totalorder %s197, %s200
    %p206 = scmp.eq.s32.totalorder %s14, 0
    %p207 = por %p205, %p206
    %p208 = scmp.ne.s32.totalorder %s197, %s200
    %p209 = scmp.eq.s32.totalorder %s19, 7
    %p210 = por %p208, %p209
    %p211 = scmp.ne.s32.totalorder %s200, %s201
    %p212 = scmp.eq.s32.totalorder %s19, 0
    %p213 = por %p211, %p212
    %p214 = scmp.ne.s32.totalorder %s200, %s201
    %p215 = scmp.eq.s32.totalorder %s20, 7
    %p216 = por %p214, %p215
    %p218 = scmp.ne.s32.totalorder %s201, %s217
    %p219 = scmp.eq.s32.totalorder %s20, 0
    %p220 = por %p218, %p219
    %p221 = scmp.le.s32.totalorder 1, %s14
    %p222 = scmp.lt.s32.totalorder %s14, 9
    %p223 = pnand %p221, %p222
    %p224 = pneg %p223
    // Predicated region
    $region9: #{pointnet_xs_forward.1} parent=5 // pred_check
      _
    $region10: #{pointnet_xs_forward.1} parent=5 // pred_check_branch
      %226 = sbr.rel (%p223) target = $region12
    $region11: #{pointnet_xs_forward.1} parent=5 // pred_region
      %s227 = ssub.s32 %s14, 1
      // Predicated region
      $region13: #{pointnet_xs_forward.1} parent=11 // pred_check
        %p228 = pneg %p61
      $region14: #{pointnet_xs_forward.1} parent=11 // pred_check_branch
        %230 = sbr.rel (%p228) target = $region16
      $region15: #{pointnet_xs_forward.1} parent=11 // pred_region
        _
      $region16: #{pointnet_xs_forward.1} parent=11 // pred_fallthru
        _
      // Predicated region
      $region17: #{pointnet_xs_forward.1} parent=11 // pred_check
        %p231 = pneg %p82
      $region18: #{pointnet_xs_forward.1} parent=11 // pred_check_branch
        %233 = sbr.rel (%p231) target = $region20
      $region19: #{pointnet_xs_forward.1} parent=11 // pred_region
        _
      $region20: #{pointnet_xs_forward.1} parent=11 // pred_fallthru
        _
      // Predicated region
      $region21: #{pointnet_xs_forward.1} parent=11 // pred_check
        %p234 = pneg %p103
      $region22: #{pointnet_xs_forward.1} parent=11 // pred_check_branch
        %236 = sbr.rel (%p234) target = $region24
      $region23: #{pointnet_xs_forward.1} parent=11 // pred_region
        _
      $region24: #{pointnet_xs_forward.1} parent=11 // pred_fallthru
        _
      // Predicated region
      $region25: #{pointnet_xs_forward.1} parent=11 // pred_check
        %p237 = pneg %p124
      $region26: #{pointnet_xs_forward.1} parent=11 // pred_check_branch
        %239 = sbr.rel (%p237) target = $region28
      $region27: #{pointnet_xs_forward.1} parent=11 // pred_region
        _
      $region28: #{pointnet_xs_forward.1} parent=11 // pred_fallthru
        _
      // Predicated region
      $region29: #{pointnet_xs_forward.1} parent=11 // pred_check
        %p240 = pneg %p145
      $region30: #{pointnet_xs_forward.1} parent=11 // pred_check_branch
        %242 = sbr.rel (%p240) target = $region32
      $region31: #{pointnet_xs_forward.1} parent=11 // pred_region
        _
      $region32: #{pointnet_xs_forward.1} parent=11 // pred_fallthru
        _
      // Predicated region
      $region33: #{pointnet_xs_forward.1} parent=11 // pred_check
        %p243 = pneg %p166
      $region34: #{pointnet_xs_forward.1} parent=11 // pred_check_branch
        %245 = sbr.rel (%p243) target = $region36
      $region35: #{pointnet_xs_forward.1} parent=11 // pred_region
        _
      $region36: #{pointnet_xs_forward.1} parent=11 // pred_fallthru
        _
      // Predicated region
      $region37: #{pointnet_xs_forward.1} parent=11 // pred_check
        %p246 = pneg %p187
      $region38: #{pointnet_xs_forward.1} parent=11 // pred_check_branch
        %248 = sbr.rel (%p246) target = $region40
      $region39: #{pointnet_xs_forward.1} parent=11 // pred_region
        _
      $region40: #{pointnet_xs_forward.1} parent=11 // pred_fallthru
        _
    $region12: #{pointnet_xs_forward.1} parent=5 // pred_fallthru
      _
    %p249 = scmp.lt.s32.totalorder %s14, 8
    // Predicated region
    $region41: #{pointnet_xs_forward.1} parent=5 // pred_check
      %p250 = pneg %p249
    $region42: #{pointnet_xs_forward.1} parent=5 // pred_check_branch
      %252 = sbr.rel (%p250) target = $region44
    $region43: #{pointnet_xs_forward.1} parent=5 // pred_region
      // Predicated region
      $region45: #{pointnet_xs_forward.1} parent=43 // pred_check
        %p253 = pneg %p34
      $region46: #{pointnet_xs_forward.1} parent=43 // pred_check_branch
        %255 = sbr.rel (%p253) target = $region48
      $region47: #{pointnet_xs_forward.1} parent=43 // pred_region
        %s256 = smul.u32 32, %s14
        %p257 = scmp.lt.s32.totalorder %s256, 255
        %s258 = scalar_select %p257, %s256, 255
        %s259 = smul.addr %s258, 8
        %s260 = scalar_lea.vmem %s0, %s259
        %s261 = smul.u32 32, %s14
      $region48: #{pointnet_xs_forward.1} parent=43 // pred_fallthru
        _
    $region44: #{pointnet_xs_forward.1} parent=5 // pred_fallthru
      _
    %p262 = scmp.le.s32.totalorder 1, %s14
    %p263 = scmp.lt.s32.totalorder %s14, 9
    %p264 = pnand %p262, %p263
    %p265 = pneg %p264
    // Predicated region
    $region49: #{pointnet_xs_forward.1} parent=5 // pred_check
      _
    $region50: #{pointnet_xs_forward.1} parent=5 // pred_check_branch
      %267 = sbr.rel (%p264) target = $region52
    $region51: #{pointnet_xs_forward.1} parent=5 // pred_region
      %s268 = ssub.s32 %s14, 1
      %s269 = smul.u32 32, %s19
      %p270 = scmp.lt.s32.totalorder %s269, 255
      %s271 = scalar_select %p270, %s269, 255
      %s272 = smul.addr %s271, 8
      %s273 = scalar_lea.vmem %s0, %s272
      %p274 = pneg %p40
      %p275 = pneg %p37
      %p276 = pneg %p61
      %p277 = pneg %p58
      %p278 = pneg %p82
      %p279 = pneg %p79
      %p280 = pneg %p103
      %p281 = pneg %p100
      %p282 = pneg %p124
      %p283 = pneg %p121
      %p284 = pneg %p145
      %p285 = pneg %p142
      %p286 = pneg %p166
      %p287 = pneg %p163
      %p288 = pneg %p187
      %p289 = pneg %p184
      %p290 = pneg %p213
      %p291 = pneg %p210
      %s292 = smul.u32 32, %s19
      %p293 = scmp.lt.s32.totalorder %s292, 255
      %s294 = scalar_select %p293, %s292, 255
      %s295 = smul.addr %s294, 8
      %s296 = scalar_lea.vmem %s8, %s295
      %s297 = smul.u32 32, %s19
      %p298 = scmp.lt.s32.totalorder %s297, 255
      %s299 = scalar_select %p298, %s297, 255
      %s300 = smul.addr %s299, 8
      %s301 = scalar_lea.vmem %s0, %s300
      %s302 = smul.u32 32, %s19
      %s303 = smul.u32 32, %s19
      %p304 = scmp.lt.s32.totalorder %s303, 255
      %s305 = scalar_select %p304, %s303, 255
      %s306 = smul.addr %s305, 8
      %s307 = scalar_lea.vmem %s8, %s306
      %s308 = smul.u32 32, %s19
      %v310 = vld [vmem:[%s301] sm:$0xff]
      %v311 = vld [vmem:[%s301 + $0x8] sm:$0xff]
      %v312 = vld [vmem:[%s301 + $0x10] sm:$0xff]
      %v313 = vld [vmem:[%s301 + $0x18] sm:$0xff]
      %v314 = vld [vmem:[%s301 + $0x20] sm:$0xff]
      %v315 = vld [vmem:[%s301 + $0x28] sm:$0xff]
      %v316 = vld [vmem:[%s301 + $0x30] sm:$0xff]
      %v317 = vld [vmem:[%s301 + $0x38] sm:$0xff]
      %v318 = vld [vmem:[%s301 + $0x40] sm:$0xff]
      %v319 = vld [vmem:[%s301 + $0x48] sm:$0xff]
      %v320 = vld [vmem:[%s301 + $0x50] sm:$0xff]
      %v321 = vld [vmem:[%s301 + $0x58] sm:$0xff]
      %v322 = vld [vmem:[%s301 + $0x60] sm:$0xff]
      %v323 = vld [vmem:[%s301 + $0x68] sm:$0xff]
      %v324 = vld [vmem:[%s301 + $0x70] sm:$0xff]
      %v325 = vld [vmem:[%s301 + $0x78] sm:$0xff]
      %v326 = vld [vmem:[%s301 + $0x80] sm:$0xff]
      %v327 = vld [vmem:[%s301 + $0x88] sm:$0xff]
      %v328 = vld [vmem:[%s301 + $0x90] sm:$0xff]
      %v329 = vld [vmem:[%s301 + $0x98] sm:$0xff]
      %v330 = vld [vmem:[%s301 + $0xa0] sm:$0xff]
      %v331 = vld [vmem:[%s301 + $0xa8] sm:$0xff]
      %v332 = vld [vmem:[%s301 + $0xb0] sm:$0xff]
      %v333 = vld [vmem:[%s301 + $0xb8] sm:$0xff]
      %v334 = vld [vmem:[%s301 + $0xc0] sm:$0xff]
      %v335 = vld [vmem:[%s301 + $0xc8] sm:$0xff]
      %v336 = vld [vmem:[%s301 + $0xd0] sm:$0xff]
      %v337 = vld [vmem:[%s301 + $0xd8] sm:$0xff]
      %v338 = vld [vmem:[%s301 + $0xe0] sm:$0xff]
      %v339 = vld [vmem:[%s301 + $0xe8] sm:$0xff]
      %v340 = vld [vmem:[%s301 + $0xf0] sm:$0xff]
      %v341 = vld [vmem:[%s301 + $0xf8] sm:$0xff]
      %v342 = vld [vmem:[%s2] sm:$0x1]
      %v343 = vld [vmem:[%s1] sm:$0x1]
      %345 = vset.pattern.permute.xlu0 0
      %346 = vperm.xlu0 %345, %v310
      %v347 = vpop.permute.xlu0 %346
      %350 = vset.pattern.permute.xlu0 0
      %351 = vperm.xlu0 %350, %v311
      %v352 = vpop.permute.xlu0 %351
      %355 = vset.pattern.permute.xlu0 0
      %356 = vperm.xlu0 %355, %v312
      %v357 = vpop.permute.xlu0 %356
      %360 = vset.pattern.permute.xlu0 0
      %361 = vperm.xlu0 %360, %v313
      %v362 = vpop.permute.xlu0 %361
      %365 = vset.pattern.permute.xlu0 0
      %366 = vperm.xlu0 %365, %v314
      %v367 = vpop.permute.xlu0 %366
      %370 = vset.pattern.permute.xlu0 0
      %371 = vperm.xlu0 %370, %v315
      %v372 = vpop.permute.xlu0 %371
      %375 = vset.pattern.permute.xlu0 0
      %376 = vperm.xlu0 %375, %v316
      %v377 = vpop.permute.xlu0 %376
      %380 = vset.pattern.permute.xlu0 0
      %381 = vperm.xlu0 %380, %v317
      %v382 = vpop.permute.xlu0 %381
      %385 = vset.pattern.permute.xlu0 0
      %386 = vperm.xlu0 %385, %v318
      %v387 = vpop.permute.xlu0 %386
      %390 = vset.pattern.permute.xlu0 0
      %391 = vperm.xlu0 %390, %v319
      %v392 = vpop.permute.xlu0 %391
      %395 = vset.pattern.permute.xlu0 0
      %396 = vperm.xlu0 %395, %v320
      %v397 = vpop.permute.xlu0 %396
      %400 = vset.pattern.permute.xlu0 0
      %401 = vperm.xlu0 %400, %v321
      %v402 = vpop.permute.xlu0 %401
      %405 = vset.pattern.permute.xlu0 0
      %406 = vperm.xlu0 %405, %v322
      %v407 = vpop.permute.xlu0 %406
      %410 = vset.pattern.permute.xlu0 0
      %411 = vperm.xlu0 %410, %v323
      %v412 = vpop.permute.xlu0 %411
      %415 = vset.pattern.permute.xlu0 0
      %416 = vperm.xlu0 %415, %v324
      %v417 = vpop.permute.xlu0 %416
      %420 = vset.pattern.permute.xlu0 0
      %421 = vperm.xlu0 %420, %v325
      %v422 = vpop.permute.xlu0 %421
      %425 = vset.pattern.permute.xlu0 0
      %426 = vperm.xlu0 %425, %v326
      %v427 = vpop.permute.xlu0 %426
      %430 = vset.pattern.permute.xlu0 0
      %431 = vperm.xlu0 %430, %v327
      %v432 = vpop.permute.xlu0 %431
      %435 = vset.pattern.permute.xlu0 0
      %436 = vperm.xlu0 %435, %v328
      %v437 = vpop.permute.xlu0 %436
      %440 = vset.pattern.permute.xlu0 0
      %441 = vperm.xlu0 %440, %v329
      %v442 = vpop.permute.xlu0 %441
      %445 = vset.pattern.permute.xlu0 0
      %446 = vperm.xlu0 %445, %v330
      %v447 = vpop.permute.xlu0 %446
      %450 = vset.pattern.permute.xlu0 0
      %451 = vperm.xlu0 %450, %v331
      %v452 = vpop.permute.xlu0 %451
      %455 = vset.pattern.permute.xlu0 0
      %456 = vperm.xlu0 %455, %v332
      %v457 = vpop.permute.xlu0 %456
      %460 = vset.pattern.permute.xlu0 0
      %461 = vperm.xlu0 %460, %v333
      %v462 = vpop.permute.xlu0 %461
      %465 = vset.pattern.permute.xlu0 0
      %466 = vperm.xlu0 %465, %v334
      %v467 = vpop.permute.xlu0 %466
      %470 = vset.pattern.permute.xlu0 0
      %471 = vperm.xlu0 %470, %v335
      %v472 = vpop.permute.xlu0 %471
      %475 = vset.pattern.permute.xlu0 0
      %476 = vperm.xlu0 %475, %v336
      %v477 = vpop.permute.xlu0 %476
      %480 = vset.pattern.permute.xlu0 0
      %481 = vperm.xlu0 %480, %v337
      %v482 = vpop.permute.xlu0 %481
      %485 = vset.pattern.permute.xlu0 0
      %486 = vperm.xlu0 %485, %v338
      %v487 = vpop.permute.xlu0 %486
      %490 = vset.pattern.permute.xlu0 0
      %491 = vperm.xlu0 %490, %v339
      %v492 = vpop.permute.xlu0 %491
      %495 = vset.pattern.permute.xlu0 0
      %496 = vperm.xlu0 %495, %v340
      %v497 = vpop.permute.xlu0 %496
      %500 = vset.pattern.permute.xlu0 0
      %501 = vperm.xlu0 %500, %v341
      %v502 = vpop.permute.xlu0 %501
      %v504 = vlaneseq
      %v505 = vshrl.u32 %v504, 7
      %v506 = vsub.s32 0, %v505
      %v507 = vrot.slane %v343, %v506
      %v508 = vmul.f32 %v347, %v507
      %v509 = vmul.f32 %v352, %v507
      %v510 = vmul.f32 %v357, %v507
      %v511 = vmul.f32 %v362, %v507
      %v512 = vmul.f32 %v367, %v507
      %v513 = vmul.f32 %v372, %v507
      %v514 = vmul.f32 %v377, %v507
      %v515 = vmul.f32 %v382, %v507
      %v516 = vmul.f32 %v387, %v507
      %v517 = vmul.f32 %v392, %v507
      %v518 = vmul.f32 %v397, %v507
      %v519 = vmul.f32 %v402, %v507
      %v520 = vmul.f32 %v407, %v507
      %v521 = vmul.f32 %v412, %v507
      %v522 = vmul.f32 %v417, %v507
      %v523 = vmul.f32 %v422, %v507
      %v524 = vmul.f32 %v427, %v507
      %v525 = vmul.f32 %v432, %v507
      %v526 = vmul.f32 %v437, %v507
      %v527 = vmul.f32 %v442, %v507
      %v528 = vmul.f32 %v447, %v507
      %v529 = vmul.f32 %v452, %v507
      %v530 = vmul.f32 %v457, %v507
      %v531 = vmul.f32 %v462, %v507
      %v532 = vmul.f32 %v467, %v507
      %v533 = vmul.f32 %v472, %v507
      %v534 = vmul.f32 %v477, %v507
      %v535 = vmul.f32 %v482, %v507
      %v536 = vmul.f32 %v487, %v507
      %v537 = vmul.f32 %v492, %v507
      %v538 = vmul.f32 %v497, %v507
      %v539 = vmul.f32 %v502, %v507
      %v541 = vlaneseq
      %v542 = vshrl.u32 %v541, 7
      %v543 = vsub.s32 0, %v542
      %v544 = vrot.slane %v342, %v543
      %v546 = vadd.f32 %v544, %v508
      %v547 = vadd.f32 %v544, %v509
      %v548 = vadd.f32 %v544, %v510
      %v549 = vadd.f32 %v544, %v511
      %v550 = vadd.f32 %v544, %v512
      %v551 = vadd.f32 %v544, %v513
      %v552 = vadd.f32 %v544, %v514
      %v553 = vadd.f32 %v544, %v515
      %v554 = vadd.f32 %v544, %v516
      %v555 = vadd.f32 %v544, %v517
      %v556 = vadd.f32 %v544, %v518
      %v557 = vadd.f32 %v544, %v519
      %v558 = vadd.f32 %v544, %v520
      %v559 = vadd.f32 %v544, %v521
      %v560 = vadd.f32 %v544, %v522
      %v561 = vadd.f32 %v544, %v523
      %v562 = vadd.f32 %v544, %v524
      %v563 = vadd.f32 %v544, %v525
      %v564 = vadd.f32 %v544, %v526
      %v565 = vadd.f32 %v544, %v527
      %v566 = vadd.f32 %v544, %v528
      %v567 = vadd.f32 %v544, %v529
      %v568 = vadd.f32 %v544, %v530
      %v569 = vadd.f32 %v544, %v531
      %v570 = vadd.f32 %v544, %v532
      %v571 = vadd.f32 %v544, %v533
      %v572 = vadd.f32 %v544, %v534
      %v573 = vadd.f32 %v544, %v535
      %v574 = vadd.f32 %v544, %v536
      %v575 = vadd.f32 %v544, %v537
      %v576 = vadd.f32 %v544, %v538
      %v577 = vadd.f32 %v544, %v539
      %v578 = vld [vmem:[%s1 + $0x1] sm:$0x1]
      %579 = vset.pattern.permute.xlu0 1
      %580 = vperm.xlu0 %579, %v310
      %v581 = vpop.permute.xlu0 %580
      %583 = vset.pattern.permute.xlu0 1
      %584 = vperm.xlu0 %583, %v311
      %v585 = vpop.permute.xlu0 %584
      %587 = vset.pattern.permute.xlu0 1
      %588 = vperm.xlu0 %587, %v312
      %v589 = vpop.permute.xlu0 %588
      %591 = vset.pattern.permute.xlu0 1
      %592 = vperm.xlu0 %591, %v313
      %v593 = vpop.permute.xlu0 %592
      %595 = vset.pattern.permute.xlu0 1
      %596 = vperm.xlu0 %595, %v314
      %v597 = vpop.permute.xlu0 %596
      %599 = vset.pattern.permute.xlu0 1
      %600 = vperm.xlu0 %599, %v315
      %v601 = vpop.permute.xlu0 %600
      %603 = vset.pattern.permute.xlu0 1
      %604 = vperm.xlu0 %603, %v316
      %v605 = vpop.permute.xlu0 %604
      %607 = vset.pattern.permute.xlu0 1
      %608 = vperm.xlu0 %607, %v317
      %v609 = vpop.permute.xlu0 %608
      %611 = vset.pattern.permute.xlu0 1
      %612 = vperm.xlu0 %611, %v318
      %v613 = vpop.permute.xlu0 %612
      %615 = vset.pattern.permute.xlu0 1
      %616 = vperm.xlu0 %615, %v319
      %v617 = vpop.permute.xlu0 %616
      %619 = vset.pattern.permute.xlu0 1
      %620 = vperm.xlu0 %619, %v320
      %v621 = vpop.permute.xlu0 %620
      %623 = vset.pattern.permute.xlu0 1
      %624 = vperm.xlu0 %623, %v321
      %v625 = vpop.permute.xlu0 %624
      %627 = vset.pattern.permute.xlu0 1
      %628 = vperm.xlu0 %627, %v322
      %v629 = vpop.permute.xlu0 %628
      %631 = vset.pattern.permute.xlu0 1
      %632 = vperm.xlu0 %631, %v323
      %v633 = vpop.permute.xlu0 %632
      %635 = vset.pattern.permute.xlu0 1
      %636 = vperm.xlu0 %635, %v324
      %v637 = vpop.permute.xlu0 %636
      %639 = vset.pattern.permute.xlu0 1
      %640 = vperm.xlu0 %639, %v325
      %v641 = vpop.permute.xlu0 %640
      %643 = vset.pattern.permute.xlu0 1
      %644 = vperm.xlu0 %643, %v326
      %v645 = vpop.permute.xlu0 %644
      %647 = vset.pattern.permute.xlu0 1
      %648 = vperm.xlu0 %647, %v327
      %v649 = vpop.permute.xlu0 %648
      %651 = vset.pattern.permute.xlu0 1
      %652 = vperm.xlu0 %651, %v328
      %v653 = vpop.permute.xlu0 %652
      %655 = vset.pattern.permute.xlu0 1
      %656 = vperm.xlu0 %655, %v329
      %v657 = vpop.permute.xlu0 %656
      %659 = vset.pattern.permute.xlu0 1
      %660 = vperm.xlu0 %659, %v330
      %v661 = vpop.permute.xlu0 %660
      %663 = vset.pattern.permute.xlu0 1
      %664 = vperm.xlu0 %663, %v331
      %v665 = vpop.permute.xlu0 %664
      %667 = vset.pattern.permute.xlu0 1
      %668 = vperm.xlu0 %667, %v332
      %v669 = vpop.permute.xlu0 %668
      %671 = vset.pattern.permute.xlu0 1
      %672 = vperm.xlu0 %671, %v333
      %v673 = vpop.permute.xlu0 %672
      %675 = vset.pattern.permute.xlu0 1
      %676 = vperm.xlu0 %675, %v334
      %v677 = vpop.permute.xlu0 %676
      %679 = vset.pattern.permute.xlu0 1
      %680 = vperm.xlu0 %679, %v335
      %v681 = vpop.permute.xlu0 %680
      %683 = vset.pattern.permute.xlu0 1
      %684 = vperm.xlu0 %683, %v336
      %v685 = vpop.permute.xlu0 %684
      %687 = vset.pattern.permute.xlu0 1
      %688 = vperm.xlu0 %687, %v337
      %v689 = vpop.permute.xlu0 %688
      %691 = vset.pattern.permute.xlu0 1
      %692 = vperm.xlu0 %691, %v338
      %v693 = vpop.permute.xlu0 %692
      %695 = vset.pattern.permute.xlu0 1
      %696 = vperm.xlu0 %695, %v339
      %v697 = vpop.permute.xlu0 %696
      %699 = vset.pattern.permute.xlu0 1
      %700 = vperm.xlu0 %699, %v340
      %v701 = vpop.permute.xlu0 %700
      %703 = vset.pattern.permute.xlu0 1
      %704 = vperm.xlu0 %703, %v341
      %v705 = vpop.permute.xlu0 %704
      %v707 = vlaneseq
      %v708 = vshrl.u32 %v707, 7
      %v709 = vsub.s32 0, %v708
      %v710 = vrot.slane %v578, %v709
      %v711 = vmul.f32 %v581, %v710
      %v712 = vmul.f32 %v585, %v710
      %v713 = vmul.f32 %v589, %v710
      %v714 = vmul.f32 %v593, %v710
      %v715 = vmul.f32 %v597, %v710
      %v716 = vmul.f32 %v601, %v710
      %v717 = vmul.f32 %v605, %v710
      %v718 = vmul.f32 %v609, %v710
      %v719 = vmul.f32 %v613, %v710
      %v720 = vmul.f32 %v617, %v710
      %v721 = vmul.f32 %v621, %v710
      %v722 = vmul.f32 %v625, %v710
      %v723 = vmul.f32 %v629, %v710
      %v724 = vmul.f32 %v633, %v710
      %v725 = vmul.f32 %v637, %v710
      %v726 = vmul.f32 %v641, %v710
      %v727 = vmul.f32 %v645, %v710
      %v728 = vmul.f32 %v649, %v710
      %v729 = vmul.f32 %v653, %v710
      %v730 = vmul.f32 %v657, %v710
      %v731 = vmul.f32 %v661, %v710
      %v732 = vmul.f32 %v665, %v710
      %v733 = vmul.f32 %v669, %v710
      %v734 = vmul.f32 %v673, %v710
      %v735 = vmul.f32 %v677, %v710
      %v736 = vmul.f32 %v681, %v710
      %v737 = vmul.f32 %v685, %v710
      %v738 = vmul.f32 %v689, %v710
      %v739 = vmul.f32 %v693, %v710
      %v740 = vmul.f32 %v697, %v710
      %v741 = vmul.f32 %v701, %v710
      %v742 = vmul.f32 %v705, %v710
      %v743 = vadd.f32 %v546, %v711
      %v744 = vadd.f32 %v547, %v712
      %v745 = vadd.f32 %v548, %v713
      %v746 = vadd.f32 %v549, %v714
      %v747 = vadd.f32 %v550, %v715
      %v748 = vadd.f32 %v551, %v716
      %v749 = vadd.f32 %v552, %v717
      %v750 = vadd.f32 %v553, %v718
      %v751 = vadd.f32 %v554, %v719
      %v752 = vadd.f32 %v555, %v720
      %v753 = vadd.f32 %v556, %v721
      %v754 = vadd.f32 %v557, %v722
      %v755 = vadd.f32 %v558, %v723
      %v756 = vadd.f32 %v559, %v724
      %v757 = vadd.f32 %v560, %v725
      %v758 = vadd.f32 %v561, %v726
      %v759 = vadd.f32 %v562, %v727
      %v760 = vadd.f32 %v563, %v728
      %v761 = vadd.f32 %v564, %v729
      %v762 = vadd.f32 %v565, %v730
      %v763 = vadd.f32 %v566, %v731
      %v764 = vadd.f32 %v567, %v732
      %v765 = vadd.f32 %v568, %v733
      %v766 = vadd.f32 %v569, %v734
      %v767 = vadd.f32 %v570, %v735
      %v768 = vadd.f32 %v571, %v736
      %v769 = vadd.f32 %v572, %v737
      %v770 = vadd.f32 %v573, %v738
      %v771 = vadd.f32 %v574, %v739
      %v772 = vadd.f32 %v575, %v740
      %v773 = vadd.f32 %v576, %v741
      %v774 = vadd.f32 %v577, %v742
      %v775 = vld [vmem:[%s1 + $0x2] sm:$0x1]
      %776 = vset.pattern.permute.xlu0 2
      %777 = vperm.xlu0 %776, %v310
      %v778 = vpop.permute.xlu0 %777
      %780 = vset.pattern.permute.xlu0 2
      %781 = vperm.xlu0 %780, %v311
      %v782 = vpop.permute.xlu0 %781
      %784 = vset.pattern.permute.xlu0 2
      %785 = vperm.xlu0 %784, %v312
      %v786 = vpop.permute.xlu0 %785
      %788 = vset.pattern.permute.xlu0 2
      %789 = vperm.xlu0 %788, %v313
      %v790 = vpop.permute.xlu0 %789
      %792 = vset.pattern.permute.xlu0 2
      %793 = vperm.xlu0 %792, %v314
      %v794 = vpop.permute.xlu0 %793
      %796 = vset.pattern.permute.xlu0 2
      %797 = vperm.xlu0 %796, %v315
      %v798 = vpop.permute.xlu0 %797
      %800 = vset.pattern.permute.xlu0 2
      %801 = vperm.xlu0 %800, %v316
      %v802 = vpop.permute.xlu0 %801
      %804 = vset.pattern.permute.xlu0 2
      %805 = vperm.xlu0 %804, %v317
      %v806 = vpop.permute.xlu0 %805
      %808 = vset.pattern.permute.xlu0 2
      %809 = vperm.xlu0 %808, %v318
      %v810 = vpop.permute.xlu0 %809
      %812 = vset.pattern.permute.xlu0 2
      %813 = vperm.xlu0 %812, %v319
      %v814 = vpop.permute.xlu0 %813
      %816 = vset.pattern.permute.xlu0 2
      %817 = vperm.xlu0 %816, %v320
      %v818 = vpop.permute.xlu0 %817
      %820 = vset.pattern.permute.xlu0 2
      %821 = vperm.xlu0 %820, %v321
      %v822 = vpop.permute.xlu0 %821
      %824 = vset.pattern.permute.xlu0 2
      %825 = vperm.xlu0 %824, %v322
      %v826 = vpop.permute.xlu0 %825
      %828 = vset.pattern.permute.xlu0 2
      %829 = vperm.xlu0 %828, %v323
      %v830 = vpop.permute.xlu0 %829
      %832 = vset.pattern.permute.xlu0 2
      %833 = vperm.xlu0 %832, %v324
      %v834 = vpop.permute.xlu0 %833
      %836 = vset.pattern.permute.xlu0 2
      %837 = vperm.xlu0 %836, %v325
      %v838 = vpop.permute.xlu0 %837
      %840 = vset.pattern.permute.xlu0 2
      %841 = vperm.xlu0 %840, %v326
      %v842 = vpop.permute.xlu0 %841
      %844 = vset.pattern.permute.xlu0 2
      %845 = vperm.xlu0 %844, %v327
      %v846 = vpop.permute.xlu0 %845
      %848 = vset.pattern.permute.xlu0 2
      %849 = vperm.xlu0 %848, %v328
      %v850 = vpop.permute.xlu0 %849
      %852 = vset.pattern.permute.xlu0 2
      %853 = vperm.xlu0 %852, %v329
      %v854 = vpop.permute.xlu0 %853
      %856 = vset.pattern.permute.xlu0 2
      %857 = vperm.xlu0 %856, %v330
      %v858 = vpop.permute.xlu0 %857
      %860 = vset.pattern.permute.xlu0 2
      %861 = vperm.xlu0 %860, %v331
      %v862 = vpop.permute.xlu0 %861
      %864 = vset.pattern.permute.xlu0 2
      %865 = vperm.xlu0 %864, %v332
      %v866 = vpop.permute.xlu0 %865
      %868 = vset.pattern.permute.xlu0 2
      %869 = vperm.xlu0 %868, %v333
      %v870 = vpop.permute.xlu0 %869
      %872 = vset.pattern.permute.xlu0 2
      %873 = vperm.xlu0 %872, %v334
      %v874 = vpop.permute.xlu0 %873
      %876 = vset.pattern.permute.xlu0 2
      %877 = vperm.xlu0 %876, %v335
      %v878 = vpop.permute.xlu0 %877
      %880 = vset.pattern.permute.xlu0 2
      %881 = vperm.xlu0 %880, %v336
      %v882 = vpop.permute.xlu0 %881
      %884 = vset.pattern.permute.xlu0 2
      %885 = vperm.xlu0 %884, %v337
      %v886 = vpop.permute.xlu0 %885
      %888 = vset.pattern.permute.xlu0 2
      %889 = vperm.xlu0 %888, %v338
      %v890 = vpop.permute.xlu0 %889
      %892 = vset.pattern.permute.xlu0 2
      %893 = vperm.xlu0 %892, %v339
      %v894 = vpop.permute.xlu0 %893
      %896 = vset.pattern.permute.xlu0 2
      %897 = vperm.xlu0 %896, %v340
      %v898 = vpop.permute.xlu0 %897
      %900 = vset.pattern.permute.xlu0 2
      %901 = vperm.xlu0 %900, %v341
      %v902 = vpop.permute.xlu0 %901
      %v904 = vlaneseq
      %v905 = vshrl.u32 %v904, 7
      %v906 = vsub.s32 0, %v905
      %v907 = vrot.slane %v775, %v906
      %v908 = vmul.f32 %v778, %v907
      %v909 = vmul.f32 %v782, %v907
      %v910 = vmul.f32 %v786, %v907
      %v911 = vmul.f32 %v790, %v907
      %v912 = vmul.f32 %v794, %v907
      %v913 = vmul.f32 %v798, %v907
      %v914 = vmul.f32 %v802, %v907
      %v915 = vmul.f32 %v806, %v907
      %v916 = vmul.f32 %v810, %v907
      %v917 = vmul.f32 %v814, %v907
      %v918 = vmul.f32 %v818, %v907
      %v919 = vmul.f32 %v822, %v907
      %v920 = vmul.f32 %v826, %v907
      %v921 = vmul.f32 %v830, %v907
      %v922 = vmul.f32 %v834, %v907
      %v923 = vmul.f32 %v838, %v907
      %v924 = vmul.f32 %v842, %v907
      %v925 = vmul.f32 %v846, %v907
      %v926 = vmul.f32 %v850, %v907
      %v927 = vmul.f32 %v854, %v907
      %v928 = vmul.f32 %v858, %v907
      %v929 = vmul.f32 %v862, %v907
      %v930 = vmul.f32 %v866, %v907
      %v931 = vmul.f32 %v870, %v907
      %v932 = vmul.f32 %v874, %v907
      %v933 = vmul.f32 %v878, %v907
      %v934 = vmul.f32 %v882, %v907
      %v935 = vmul.f32 %v886, %v907
      %v936 = vmul.f32 %v890, %v907
      %v937 = vmul.f32 %v894, %v907
      %v938 = vmul.f32 %v898, %v907
      %v939 = vmul.f32 %v902, %v907
      %v940 = vadd.f32 %v743, %v908
      %v941 = vadd.f32 %v744, %v909
      %v942 = vadd.f32 %v745, %v910
      %v943 = vadd.f32 %v746, %v911
      %v944 = vadd.f32 %v747, %v912
      %v945 = vadd.f32 %v748, %v913
      %v946 = vadd.f32 %v749, %v914
      %v947 = vadd.f32 %v750, %v915
      %v948 = vadd.f32 %v751, %v916
      %v949 = vadd.f32 %v752, %v917
      %v950 = vadd.f32 %v753, %v918
      %v951 = vadd.f32 %v754, %v919
      %v952 = vadd.f32 %v755, %v920
      %v953 = vadd.f32 %v756, %v921
      %v954 = vadd.f32 %v757, %v922
      %v955 = vadd.f32 %v758, %v923
      %v956 = vadd.f32 %v759, %v924
      %v957 = vadd.f32 %v760, %v925
      %v958 = vadd.f32 %v761, %v926
      %v959 = vadd.f32 %v762, %v927
      %v960 = vadd.f32 %v763, %v928
      %v961 = vadd.f32 %v764, %v929
      %v962 = vadd.f32 %v765, %v930
      %v963 = vadd.f32 %v766, %v931
      %v964 = vadd.f32 %v767, %v932
      %v965 = vadd.f32 %v768, %v933
      %v966 = vadd.f32 %v769, %v934
      %v967 = vadd.f32 %v770, %v935
      %v968 = vadd.f32 %v771, %v936
      %v969 = vadd.f32 %v772, %v937
      %v970 = vadd.f32 %v773, %v938
      %v971 = vadd.f32 %v774, %v939
      %v972 = vld [vmem:[%s1 + $0x3] sm:$0x1]
      %973 = vset.pattern.permute.xlu0 3
      %974 = vperm.xlu0 %973, %v310
      %v975 = vpop.permute.xlu0 %974
      %977 = vset.pattern.permute.xlu0 3
      %978 = vperm.xlu0 %977, %v311
      %v979 = vpop.permute.xlu0 %978
      %981 = vset.pattern.permute.xlu0 3
      %982 = vperm.xlu0 %981, %v312
      %v983 = vpop.permute.xlu0 %982
      %985 = vset.pattern.permute.xlu0 3
      %986 = vperm.xlu0 %985, %v313
      %v987 = vpop.permute.xlu0 %986
      %989 = vset.pattern.permute.xlu0 3
      %990 = vperm.xlu0 %989, %v314
      %v991 = vpop.permute.xlu0 %990
      %993 = vset.pattern.permute.xlu0 3
      %994 = vperm.xlu0 %993, %v315
      %v995 = vpop.permute.xlu0 %994
      %997 = vset.pattern.permute.xlu0 3
      %998 = vperm.xlu0 %997, %v316
      %v999 = vpop.permute.xlu0 %998
      %1001 = vset.pattern.permute.xlu0 3
      %1002 = vperm.xlu0 %1001, %v317
      %v1003 = vpop.permute.xlu0 %1002
      %1005 = vset.pattern.permute.xlu0 3
      %1006 = vperm.xlu0 %1005, %v318
      %v1007 = vpop.permute.xlu0 %1006
      %1009 = vset.pattern.permute.xlu0 3
      %1010 = vperm.xlu0 %1009, %v319
      %v1011 = vpop.permute.xlu0 %1010
      %1013 = vset.pattern.permute.xlu0 3
      %1014 = vperm.xlu0 %1013, %v320
      %v1015 = vpop.permute.xlu0 %1014
      %1017 = vset.pattern.permute.xlu0 3
      %1018 = vperm.xlu0 %1017, %v321
      %v1019 = vpop.permute.xlu0 %1018
      %1021 = vset.pattern.permute.xlu0 3
      %1022 = vperm.xlu0 %1021, %v322
      %v1023 = vpop.permute.xlu0 %1022
      %1025 = vset.pattern.permute.xlu0 3
      %1026 = vperm.xlu0 %1025, %v323
      %v1027 = vpop.permute.xlu0 %1026
      %1029 = vset.pattern.permute.xlu0 3
      %1030 = vperm.xlu0 %1029, %v324
      %v1031 = vpop.permute.xlu0 %1030
      %1033 = vset.pattern.permute.xlu0 3
      %1034 = vperm.xlu0 %1033, %v325
      %v1035 = vpop.permute.xlu0 %1034
      %1037 = vset.pattern.permute.xlu0 3
      %1038 = vperm.xlu0 %1037, %v326
      %v1039 = vpop.permute.xlu0 %1038
      %1041 = vset.pattern.permute.xlu0 3
      %1042 = vperm.xlu0 %1041, %v327
      %v1043 = vpop.permute.xlu0 %1042
      %1045 = vset.pattern.permute.xlu0 3
      %1046 = vperm.xlu0 %1045, %v328
      %v1047 = vpop.permute.xlu0 %1046
      %1049 = vset.pattern.permute.xlu0 3
      %1050 = vperm.xlu0 %1049, %v329
      %v1051 = vpop.permute.xlu0 %1050
      %1053 = vset.pattern.permute.xlu0 3
      %1054 = vperm.xlu0 %1053, %v330
      %v1055 = vpop.permute.xlu0 %1054
      %1057 = vset.pattern.permute.xlu0 3
      %1058 = vperm.xlu0 %1057, %v331
      %v1059 = vpop.permute.xlu0 %1058
      %1061 = vset.pattern.permute.xlu0 3
      %1062 = vperm.xlu0 %1061, %v332
      %v1063 = vpop.permute.xlu0 %1062
      %1065 = vset.pattern.permute.xlu0 3
      %1066 = vperm.xlu0 %1065, %v333
      %v1067 = vpop.permute.xlu0 %1066
      %1069 = vset.pattern.permute.xlu0 3
      %1070 = vperm.xlu0 %1069, %v334
      %v1071 = vpop.permute.xlu0 %1070
      %1073 = vset.pattern.permute.xlu0 3
      %1074 = vperm.xlu0 %1073, %v335
      %v1075 = vpop.permute.xlu0 %1074
      %1077 = vset.pattern.permute.xlu0 3
      %1078 = vperm.xlu0 %1077, %v336
      %v1079 = vpop.permute.xlu0 %1078
      %1081 = vset.pattern.permute.xlu0 3
      %1082 = vperm.xlu0 %1081, %v337
      %v1083 = vpop.permute.xlu0 %1082
      %1085 = vset.pattern.permute.xlu0 3
      %1086 = vperm.xlu0 %1085, %v338
      %v1087 = vpop.permute.xlu0 %1086
      %1089 = vset.pattern.permute.xlu0 3
      %1090 = vperm.xlu0 %1089, %v339
      %v1091 = vpop.permute.xlu0 %1090
      %1093 = vset.pattern.permute.xlu0 3
      %1094 = vperm.xlu0 %1093, %v340
      %v1095 = vpop.permute.xlu0 %1094
      %1097 = vset.pattern.permute.xlu0 3
      %1098 = vperm.xlu0 %1097, %v341
      %v1099 = vpop.permute.xlu0 %1098
      %v1101 = vlaneseq
      %v1102 = vshrl.u32 %v1101, 7
      %v1103 = vsub.s32 0, %v1102
      %v1104 = vrot.slane %v972, %v1103
      %v1105 = vmul.f32 %v975, %v1104
      %v1106 = vmul.f32 %v979, %v1104
      %v1107 = vmul.f32 %v983, %v1104
      %v1108 = vmul.f32 %v987, %v1104
      %v1109 = vmul.f32 %v991, %v1104
      %v1110 = vmul.f32 %v995, %v1104
      %v1111 = vmul.f32 %v999, %v1104
      %v1112 = vmul.f32 %v1003, %v1104
      %v1113 = vmul.f32 %v1007, %v1104
      %v1114 = vmul.f32 %v1011, %v1104
      %v1115 = vmul.f32 %v1015, %v1104
      %v1116 = vmul.f32 %v1019, %v1104
      %v1117 = vmul.f32 %v1023, %v1104
      %v1118 = vmul.f32 %v1027, %v1104
      %v1119 = vmul.f32 %v1031, %v1104
      %v1120 = vmul.f32 %v1035, %v1104
      %v1121 = vmul.f32 %v1039, %v1104
      %v1122 = vmul.f32 %v1043, %v1104
      %v1123 = vmul.f32 %v1047, %v1104
      %v1124 = vmul.f32 %v1051, %v1104
      %v1125 = vmul.f32 %v1055, %v1104
      %v1126 = vmul.f32 %v1059, %v1104
      %v1127 = vmul.f32 %v1063, %v1104
      %v1128 = vmul.f32 %v1067, %v1104
      %v1129 = vmul.f32 %v1071, %v1104
      %v1130 = vmul.f32 %v1075, %v1104
      %v1131 = vmul.f32 %v1079, %v1104
      %v1132 = vmul.f32 %v1083, %v1104
      %v1133 = vmul.f32 %v1087, %v1104
      %v1134 = vmul.f32 %v1091, %v1104
      %v1135 = vmul.f32 %v1095, %v1104
      %v1136 = vmul.f32 %v1099, %v1104
      %v1137 = vadd.f32 %v940, %v1105
      %v1138 = vadd.f32 %v941, %v1106
      %v1139 = vadd.f32 %v942, %v1107
      %v1140 = vadd.f32 %v943, %v1108
      %v1141 = vadd.f32 %v944, %v1109
      %v1142 = vadd.f32 %v945, %v1110
      %v1143 = vadd.f32 %v946, %v1111
      %v1144 = vadd.f32 %v947, %v1112
      %v1145 = vadd.f32 %v948, %v1113
      %v1146 = vadd.f32 %v949, %v1114
      %v1147 = vadd.f32 %v950, %v1115
      %v1148 = vadd.f32 %v951, %v1116
      %v1149 = vadd.f32 %v952, %v1117
      %v1150 = vadd.f32 %v953, %v1118
      %v1151 = vadd.f32 %v954, %v1119
      %v1152 = vadd.f32 %v955, %v1120
      %v1153 = vadd.f32 %v956, %v1121
      %v1154 = vadd.f32 %v957, %v1122
      %v1155 = vadd.f32 %v958, %v1123
      %v1156 = vadd.f32 %v959, %v1124
      %v1157 = vadd.f32 %v960, %v1125
      %v1158 = vadd.f32 %v961, %v1126
      %v1159 = vadd.f32 %v962, %v1127
      %v1160 = vadd.f32 %v963, %v1128
      %v1161 = vadd.f32 %v964, %v1129
      %v1162 = vadd.f32 %v965, %v1130
      %v1163 = vadd.f32 %v966, %v1131
      %v1164 = vadd.f32 %v967, %v1132
      %v1165 = vadd.f32 %v968, %v1133
      %v1166 = vadd.f32 %v969, %v1134
      %v1167 = vadd.f32 %v970, %v1135
      %v1168 = vadd.f32 %v971, %v1136
      %v1169 = vmax.f32 %v1137, %v1139
      %v1170 = vmax.f32 %v1138, %v1140
      %v1171 = vmax.f32 %v1169, %v1141
      %v1172 = vmax.f32 %v1170, %v1142
      %v1173 = vmax.f32 %v1171, %v1143
      %v1174 = vmax.f32 %v1172, %v1144
      %v1175 = vmax.f32 %v1173, %v1145
      %v1176 = vmax.f32 %v1174, %v1146
      %v1177 = vmax.f32 %v1175, %v1147
      %v1178 = vmax.f32 %v1176, %v1148
      %v1179 = vmax.f32 %v1177, %v1149
      %v1180 = vmax.f32 %v1178, %v1150
      %v1181 = vmax.f32 %v1179, %v1151
      %v1182 = vmax.f32 %v1180, %v1152
      %v1183 = vmax.f32 %v1181, %v1182
      %v1184 = vrot.slane %v1183, 4
      %v1185 = vmax.f32 %v1183, %v1184
      %v1186 = vrot.slane %v1185, 2
      %v1187 = vmax.f32 %v1185, %v1186
      %v1188 = vrot.slane %v1187, 1
      %v1189 = vmax.f32 %v1187, %v1188
      %v1190 = vmax.f32 %v1153, %v1155
      %v1191 = vmax.f32 %v1154, %v1156
      %v1192 = vmax.f32 %v1190, %v1157
      %v1193 = vmax.f32 %v1191, %v1158
      %v1194 = vmax.f32 %v1192, %v1159
      %v1195 = vmax.f32 %v1193, %v1160
      %v1196 = vmax.f32 %v1194, %v1161
      %v1197 = vmax.f32 %v1195, %v1162
      %v1198 = vmax.f32 %v1196, %v1163
      %v1199 = vmax.f32 %v1197, %v1164
      %v1200 = vmax.f32 %v1198, %v1165
      %v1201 = vmax.f32 %v1199, %v1166
      %v1202 = vmax.f32 %v1200, %v1167
      %v1203 = vmax.f32 %v1201, %v1168
      %v1204 = vmax.f32 %v1202, %v1203
      %v1205 = vrot.slane %v1204, 4
      %v1206 = vmax.f32 %v1204, %v1205
      %v1207 = vrot.slane %v1206, 2
      %v1208 = vmax.f32 %v1206, %v1207
      %v1209 = vrot.slane %v1208, 1
      %v1210 = vmax.f32 %v1208, %v1209
      %v1211 = vpack.c.bf16 %v1189, %v1189
      %v1212 = vpack.c.bf16 %v1210, %v1210
      %v1213 = vld [vmem:[%s4] sm:$0xf]
      %v1214 = vld [vmem:[%s4 + $0x4] sm:$0xf]
      %v1215 = vld [vmem:[%s4 + $0x8] sm:$0xf]
      %v1216 = vld [vmem:[%s4 + $0xc] sm:$0xf]
      %v1217 = vld [vmem:[%s4 + $0x10] sm:$0xf]
      %v1218 = vld [vmem:[%s4 + $0x14] sm:$0xf]
      %v1219 = vld [vmem:[%s4 + $0x18] sm:$0xf]
      %v1220 = vld [vmem:[%s4 + $0x1c] sm:$0xf]
      %v1221 = vld [vmem:[%s4 + $0x20] sm:$0xf]
      %v1222 = vld [vmem:[%s4 + $0x24] sm:$0xf]
      %v1223 = vld [vmem:[%s4 + $0x28] sm:$0xf]
      %v1224 = vld [vmem:[%s4 + $0x2c] sm:$0xf]
      %v1225 = vld [vmem:[%s4 + $0x30] sm:$0xf]
      %v1226 = vld [vmem:[%s4 + $0x34] sm:$0xf]
      %v1227 = vld [vmem:[%s4 + $0x38] sm:$0xf]
      %v1228 = vld [vmem:[%s4 + $0x3c] sm:$0xf]
      %v1229 = vld [vmem:[%s5] sm:$0x1]
      %v1231 = vlaneseq
      %v1232 = vshrl.u32 %v1231, 7
      %v1233 = vsub.s32 0, %v1232
      %v1234 = vrot.slane %v1229, %v1233
      %v1238 = vunpack.c.l.b16 %v1211
      %v1239 = vunpack.c.l.b16 %v1212
      %vm1240 = vcmask 1041409
      %v1241 = vsel %vm1240, %v1239, %v1238
      %v1242 = vpack.c.b16 %v1241, %v1241
      %v1260 = vunpack.c.l.b16 %v1213
      %v1261 = vunpack.c.l.b16 %v1214
      %v1262 = vunpack.c.l.b16 %v1215
      %v1263 = vunpack.c.l.b16 %v1216
      %v1264 = vunpack.c.l.b16 %v1217
      %v1265 = vunpack.c.l.b16 %v1218
      %v1266 = vunpack.c.l.b16 %v1219
      %v1267 = vunpack.c.l.b16 %v1220
      %v1268 = vunpack.c.l.b16 %v1221
      %v1269 = vunpack.c.l.b16 %v1222
      %v1270 = vunpack.c.l.b16 %v1223
      %v1271 = vunpack.c.l.b16 %v1224
      %v1272 = vunpack.c.l.b16 %v1225
      %v1273 = vunpack.c.l.b16 %v1226
      %v1274 = vunpack.c.l.b16 %v1227
      %v1275 = vunpack.c.l.b16 %v1228
      %v1276 = vpack.c.b16 %v1261, %v1260
      %v1277 = vpack.c.b16 %v1263, %v1262
      %v1278 = vpack.c.b16 %v1265, %v1264
      %v1279 = vpack.c.b16 %v1267, %v1266
      %v1280 = vpack.c.b16 %v1269, %v1268
      %v1281 = vpack.c.b16 %v1271, %v1270
      %v1282 = vpack.c.b16 %v1273, %v1272
      %v1283 = vpack.c.b16 %v1275, %v1274
      %1292 = vmatprep.subr.bf16.mxu0 0
      %1293 = vmatpush1.bf16.msra.mxu0 %v1276
      %1294 = vmatprep.subr.bf16.mxu0 0
      %1295 = vmatpush1.bf16.msra.mxu0 %v1277
      %1296 = vmatprep.subr.bf16.mxu0 0
      %1297 = vmatpush1.bf16.msra.mxu0 %v1278
      %1298 = vmatprep.subr.bf16.mxu0 0
      %1299 = vmatpush1.bf16.msra.mxu0 %v1279
      %1300 = vmatprep.subr.bf16.mxu0 0
      %1301 = vmatpush1.bf16.msra.mxu0 %v1280
      %1302 = vmatprep.subr.bf16.mxu0 0
      %1303 = vmatpush1.bf16.msra.mxu0 %v1281
      %1304 = vmatprep.subr.bf16.mxu0 0
      %1305 = vmatpush1.bf16.msra.mxu0 %v1282
      %1306 = vmatprep.subr.bf16.mxu0 0
      %1307 = vmatpush1.bf16.msra.mxu0 %v1283
      %1308 = vmatprep.subr.bf16.mxu0 0
      %1309 = vmatpush1.bf16.msra.mxu0 0
      %1310 = vmatprep.subr.bf16.mxu0 0
      %1311 = vmatpush1.bf16.msra.mxu0 0
      %1312 = vmatprep.subr.bf16.mxu0 0
      %1313 = vmatpush1.bf16.msra.mxu0 0
      %1314 = vmatprep.subr.bf16.mxu0 0
      %1315 = vmatpush1.bf16.msra.mxu0 0
      %1316 = vmatprep.subr.bf16.mxu0 0
      %1317 = vmatpush1.bf16.msra.mxu0 0
      %1318 = vmatprep.subr.bf16.mxu0 0
      %1319 = vmatpush1.bf16.msra.mxu0 0
      %1320 = vmatprep.subr.bf16.mxu0 0
      %1321 = vmatpush1.bf16.msra.mxu0 0
      %1322 = vmatprep.subr.bf16.mxu0 0
      %1323 = vmatpush1.bf16.msra.mxu0 0
      %1324 = vmatprep.mubr.bf16.mxu0 0
      %1325 = vmatmul.mubr.bf16.gmra.mrb[0].mxu0 %v1242
      %v1326 = vpop.f32.mrb[0].mxu0
      %v1327 = vadd.f32 %v1234, %v1326
      %v1328 = vpop.f32.mrb[0].mxu0
      %v1329 = vpop.f32.mrb[0].mxu0
      %v1330 = vpop.f32.mrb[0].mxu0
      %1331 = vdwg.mxu0
      %v1332 = vpack.c.bf16 %v1138, %v1137
      %v1333 = vpack.c.bf16 %v1140, %v1139
      %v1334 = vpack.c.bf16 %v1142, %v1141
      %v1335 = vpack.c.bf16 %v1144, %v1143
      %v1336 = vpack.c.bf16 %v1146, %v1145
      %v1337 = vpack.c.bf16 %v1148, %v1147
      %v1338 = vpack.c.bf16 %v1150, %v1149
      %v1339 = vpack.c.bf16 %v1152, %v1151
      %v1340 = vpack.c.bf16 %v1154, %v1153
      %v1341 = vpack.c.bf16 %v1156, %v1155
      %v1342 = vpack.c.bf16 %v1158, %v1157
      %v1343 = vpack.c.bf16 %v1160, %v1159
      %v1344 = vpack.c.bf16 %v1162, %v1161
      %v1345 = vpack.c.bf16 %v1164, %v1163
      %v1346 = vpack.c.bf16 %v1166, %v1165
      %v1347 = vpack.c.bf16 %v1168, %v1167
      %v1348 = vld [vmem:[%s3] sm:$0xf]
      %v1349 = vld [vmem:[%s3 + $0x4] sm:$0xf]
      %v1350 = vld [vmem:[%s3 + $0x8] sm:$0xf]
      %v1351 = vld [vmem:[%s3 + $0xc] sm:$0xf]
      %v1352 = vld [vmem:[%s3 + $0x10] sm:$0xf]
      %v1353 = vld [vmem:[%s3 + $0x14] sm:$0xf]
      %v1354 = vld [vmem:[%s3 + $0x18] sm:$0xf]
      %v1355 = vld [vmem:[%s3 + $0x1c] sm:$0xf]
      %v1356 = vld [vmem:[%s3 + $0x20] sm:$0xf]
      %v1357 = vld [vmem:[%s3 + $0x24] sm:$0xf]
      %v1358 = vld [vmem:[%s3 + $0x28] sm:$0xf]
      %v1359 = vld [vmem:[%s3 + $0x2c] sm:$0xf]
      %v1360 = vld [vmem:[%s3 + $0x30] sm:$0xf]
      %v1361 = vld [vmem:[%s3 + $0x34] sm:$0xf]
      %v1362 = vld [vmem:[%s3 + $0x38] sm:$0xf]
      %v1363 = vld [vmem:[%s3 + $0x3c] sm:$0xf]
      %v1380 = vunpack.c.l.b16 %v1348
      %v1381 = vunpack.c.l.b16 %v1349
      %v1382 = vunpack.c.l.b16 %v1350
      %v1383 = vunpack.c.l.b16 %v1351
      %v1384 = vunpack.c.l.b16 %v1352
      %v1385 = vunpack.c.l.b16 %v1353
      %v1386 = vunpack.c.l.b16 %v1354
      %v1387 = vunpack.c.l.b16 %v1355
      %v1388 = vunpack.c.l.b16 %v1356
      %v1389 = vunpack.c.l.b16 %v1357
      %v1390 = vunpack.c.l.b16 %v1358
      %v1391 = vunpack.c.l.b16 %v1359
      %v1392 = vunpack.c.l.b16 %v1360
      %v1393 = vunpack.c.l.b16 %v1361
      %v1394 = vunpack.c.l.b16 %v1362
      %v1395 = vunpack.c.l.b16 %v1363
      %v1396 = vpack.c.b16 %v1381, %v1380
      %v1397 = vpack.c.b16 %v1383, %v1382
      %v1398 = vpack.c.b16 %v1385, %v1384
      %v1399 = vpack.c.b16 %v1387, %v1386
      %v1400 = vpack.c.b16 %v1389, %v1388
      %v1401 = vpack.c.b16 %v1391, %v1390
      %v1402 = vpack.c.b16 %v1393, %v1392
      %v1403 = vpack.c.b16 %v1395, %v1394
      %1412 = vmatprep.subr.bf16.mxu0 0
      %1413 = vmatpush1.bf16.msra.mxu0 %v1396
      %1414 = vmatprep.subr.bf16.mxu0 0
      %1415 = vmatpush1.bf16.msra.mxu0 %v1397
      %1416 = vmatprep.subr.bf16.mxu0 0
      %1417 = vmatpush1.bf16.msra.mxu0 %v1398
      %1418 = vmatprep.subr.bf16.mxu0 0
      %1419 = vmatpush1.bf16.msra.mxu0 %v1399
      %1420 = vmatprep.subr.bf16.mxu0 0
      %1421 = vmatpush1.bf16.msra.mxu0 %v1400
      %1422 = vmatprep.subr.bf16.mxu0 0
      %1423 = vmatpush1.bf16.msra.mxu0 %v1401
      %1424 = vmatprep.subr.bf16.mxu0 0
      %1425 = vmatpush1.bf16.msra.mxu0 %v1402
      %1426 = vmatprep.subr.bf16.mxu0 0
      %1427 = vmatpush1.bf16.msra.mxu0 %v1403
      %1428 = vmatprep.subr.bf16.mxu0 0
      %1429 = vmatpush1.bf16.msra.mxu0 0
      %1430 = vmatprep.subr.bf16.mxu0 0
      %1431 = vmatpush1.bf16.msra.mxu0 0
      %1432 = vmatprep.subr.bf16.mxu0 0
      %1433 = vmatpush1.bf16.msra.mxu0 0
      %1434 = vmatprep.subr.bf16.mxu0 0
      %1435 = vmatpush1.bf16.msra.mxu0 0
      %1436 = vmatprep.subr.bf16.mxu0 0
      %1437 = vmatpush1.bf16.msra.mxu0 0
      %1438 = vmatprep.subr.bf16.mxu0 0
      %1439 = vmatpush1.bf16.msra.mxu0 0
      %1440 = vmatprep.subr.bf16.mxu0 0
      %1441 = vmatpush1.bf16.msra.mxu0 0
      %1442 = vmatprep.subr.bf16.mxu0 0
      %1443 = vmatpush1.bf16.msra.mxu0 0
      %1444 = vmatprep.mubr.bf16.mxu0 0
      %1445 = vmatmul.mubr.bf16.gmra.mrb[0].mxu0 %v1332
      %v1446 = vpop.f32.mrb[0].mxu0
      %v1447 = vadd.f32 0.0, %v1446
      %v1448 = vpop.f32.mrb[0].mxu0
      %v1449 = vpop.f32.mrb[0].mxu0
      %v1450 = vadd.f32 0.0, %v1449
      %v1451 = vpop.f32.mrb[0].mxu0
      %1452 = vmatprep.mubr.bf16.mxu0 0
      %1453 = vmatmul.mubr.bf16.gmra.mrb[0].mxu0 %v1333
      %v1454 = vpop.f32.mrb[0].mxu0
      %v1455 = vadd.f32 0.0, %v1454
      %v1456 = vpop.f32.mrb[0].mxu0
      %v1457 = vpop.f32.mrb[0].mxu0
      %v1458 = vadd.f32 0.0, %v1457
      %v1459 = vpop.f32.mrb[0].mxu0
      %1460 = vmatprep.mubr.bf16.mxu0 0
      %1461 = vmatmul.mubr.bf16.gmra.mrb[0].mxu0 %v1334
      %v1462 = vpop.f32.mrb[0].mxu0
      %v1463 = vadd.f32 0.0, %v1462
      %v1464 = vpop.f32.mrb[0].mxu0
      %v1465 = vpop.f32.mrb[0].mxu0
      %v1466 = vadd.f32 0.0, %v1465
      %v1467 = vpop.f32.mrb[0].mxu0
      %1468 = vmatprep.mubr.bf16.mxu0 0
      %1469 = vmatmul.mubr.bf16.gmra.mrb[0].mxu0 %v1335
      %v1470 = vpop.f32.mrb[0].mxu0
      %v1471 = vadd.f32 0.0, %v1470
      %v1472 = vpop.f32.mrb[0].mxu0
      %v1473 = vpop.f32.mrb[0].mxu0
      %v1474 = vadd.f32 0.0, %v1473
      %v1475 = vpop.f32.mrb[0].mxu0
      %1476 = vmatprep.mubr.bf16.mxu0 0
      %1477 = vmatmul.mubr.bf16.gmra.mrb[0].mxu0 %v1336
      %v1478 = vpop.f32.mrb[0].mxu0
      %v1479 = vadd.f32 0.0, %v1478
      %v1480 = vpop.f32.mrb[0].mxu0
      %v1481 = vpop.f32.mrb[0].mxu0
      %v1482 = vadd.f32 0.0, %v1481
      %v1483 = vpop.f32.mrb[0].mxu0
      %1484 = vmatprep.mubr.bf16.mxu0 0
      %1485 = vmatmul.mubr.bf16.gmra.mrb[0].mxu0 %v1337
      %v1486 = vpop.f32.mrb[0].mxu0
      %v1487 = vadd.f32 0.0, %v1486
      %v1488 = vpop.f32.mrb[0].mxu0
      %v1489 = vpop.f32.mrb[0].mxu0
      %v1490 = vadd.f32 0.0, %v1489
      %v1491 = vpop.f32.mrb[0].mxu0
      %1492 = vmatprep.mubr.bf16.mxu0 0
      %1493 = vmatmul.mubr.bf16.gmra.mrb[0].mxu0 %v1338
      %v1494 = vpop.f32.mrb[0].mxu0
      %v1495 = vadd.f32 0.0, %v1494
      %v1496 = vpop.f32.mrb[0].mxu0
      %v1497 = vpop.f32.mrb[0].mxu0
      %v1498 = vadd.f32 0.0, %v1497
      %v1499 = vpop.f32.mrb[0].mxu0
      %1500 = vmatprep.mubr.bf16.mxu0 0
      %1501 = vmatmul.mubr.bf16.gmra.mrb[0].mxu0 %v1339
      %v1502 = vpop.f32.mrb[0].mxu0
      %v1503 = vadd.f32 0.0, %v1502
      %v1504 = vpop.f32.mrb[0].mxu0
      %v1505 = vpop.f32.mrb[0].mxu0
      %v1506 = vadd.f32 0.0, %v1505
      %v1507 = vpop.f32.mrb[0].mxu0
      %1508 = vmatprep.mubr.bf16.mxu0 0
      %1509 = vmatmul.mubr.bf16.gmra.mrb[0].mxu0 %v1340
      %v1510 = vpop.f32.mrb[0].mxu0
      %v1511 = vadd.f32 0.0, %v1510
      %v1512 = vpop.f32.mrb[0].mxu0
      %v1513 = vpop.f32.mrb[0].mxu0
      %v1514 = vadd.f32 0.0, %v1513
      %v1515 = vpop.f32.mrb[0].mxu0
      %1516 = vmatprep.mubr.bf16.mxu0 0
      %1517 = vmatmul.mubr.bf16.gmra.mrb[0].mxu0 %v1341
      %v1518 = vpop.f32.mrb[0].mxu0
      %v1519 = vadd.f32 0.0, %v1518
      %v1520 = vpop.f32.mrb[0].mxu0
      %v1521 = vpop.f32.mrb[0].mxu0
      %v1522 = vadd.f32 0.0, %v1521
      %v1523 = vpop.f32.mrb[0].mxu0
      %1524 = vmatprep.mubr.bf16.mxu0 0
      %1525 = vmatmul.mubr.bf16.gmra.mrb[0].mxu0 %v1342
      %v1526 = vpop.f32.mrb[0].mxu0
      %v1527 = vadd.f32 0.0, %v1526
      %v1528 = vpop.f32.mrb[0].mxu0
      %v1529 = vpop.f32.mrb[0].mxu0
      %v1530 = vadd.f32 0.0, %v1529
      %v1531 = vpop.f32.mrb[0].mxu0
      %1532 = vmatprep.mubr.bf16.mxu0 0
      %1533 = vmatmul.mubr.bf16.gmra.mrb[0].mxu0 %v1343
      %v1534 = vpop.f32.mrb[0].mxu0
      %v1535 = vadd.f32 0.0, %v1534
      %v1536 = vpop.f32.mrb[0].mxu0
      %v1537 = vpop.f32.mrb[0].mxu0
      %v1538 = vadd.f32 0.0, %v1537
      %v1539 = vpop.f32.mrb[0].mxu0
      %1540 = vmatprep.mubr.bf16.mxu0 0
      %1541 = vmatmul.mubr.bf16.gmra.mrb[0].mxu0 %v1344
      %v1542 = vpop.f32.mrb[0].mxu0
      %v1543 = vadd.f32 0.0, %v1542
      %v1544 = vpop.f32.mrb[0].mxu0
      %v1545 = vpop.f32.mrb[0].mxu0
      %v1546 = vadd.f32 0.0, %v1545
      %v1547 = vpop.f32.mrb[0].mxu0
      %1548 = vmatprep.mubr.bf16.mxu0 0
      %1549 = vmatmul.mubr.bf16.gmra.mrb[0].mxu0 %v1345
      %v1550 = vpop.f32.mrb[0].mxu0
      %v1551 = vadd.f32 0.0, %v1550
      %v1552 = vpop.f32.mrb[0].mxu0
      %v1553 = vpop.f32.mrb[0].mxu0
      %v1554 = vadd.f32 0.0, %v1553
      %v1555 = vpop.f32.mrb[0].mxu0
      %1556 = vmatprep.mubr.bf16.mxu0 0
      %1557 = vmatmul.mubr.bf16.gmra.mrb[0].mxu0 %v1346
      %v1558 = vpop.f32.mrb[0].mxu0
      %v1559 = vadd.f32 0.0, %v1558
      %v1560 = vpop.f32.mrb[0].mxu0
      %v1561 = vpop.f32.mrb[0].mxu0
      %v1562 = vadd.f32 0.0, %v1561
      %v1563 = vpop.f32.mrb[0].mxu0
      %1564 = vmatprep.mubr.bf16.mxu0 0
      %1565 = vmatmul.mubr.bf16.gmra.mrb[0].mxu0 %v1347
      %v1566 = vpop.f32.mrb[0].mxu0
      %v1567 = vadd.f32 0.0, %v1566
      %v1568 = vpop.f32.mrb[0].mxu0
      %v1569 = vpop.f32.mrb[0].mxu0
      %v1570 = vadd.f32 0.0, %v1569
      %v1571 = vpop.f32.mrb[0].mxu0
      %1572 = vdwg.mxu0
      %v1575 = vunpack.c.l.s4 1966171168
      %v1576 = vunpack.c.0.s8 %v1575
      %v1577 = vlaneseq
      %v1578 = vshrl.u32 %v1577, 7
      %v1579 = vsub.s32 %v1576, %v1578
      %v1580 = vrot.slane %v1327, %v1579
      %v1581 = vcombine.high %v1580, %v1580
      %v1583 = vunpack.c.l.s4 1966171168
      %v1584 = vunpack.c.0.s8 %v1583
      %v1585 = vlaneseq
      %v1586 = vshrl.u32 %v1585, 7
      %v1587 = vsub.s32 %v1584, %v1586
      %v1588 = vrot.slane %v1580, %v1587
      %v1590 = vunpack.c.l.s4 1966171168
      %v1591 = vunpack.c.0.s8 %v1590
      %v1592 = vlaneseq
      %v1593 = vshrl.u32 %v1592, 7
      %v1594 = vsub.s32 %v1591, %v1593
      %v1595 = vrot.slane %v1581, %v1594
      %v1596 = vlaneseq
      %v1597 = vshrl.u32 %v1596, 7
      %v1598 = vsub.s32 0, %v1597
      %v1599 = vrot.slane %v1588, %v1598
      %v1600 = vlaneseq
      %v1601 = vshrl.u32 %v1600, 7
      %v1602 = vsub.s32 0, %v1601
      %v1603 = vrot.slane %v1595, %v1602
      %v1606 = vadd.f32 %v1447, %v1599
      %v1607 = vadd.f32 %v1450, %v1599
      %v1608 = vadd.f32 %v1455, %v1599
      %v1609 = vadd.f32 %v1458, %v1599
      %v1610 = vadd.f32 %v1463, %v1599
      %v1611 = vadd.f32 %v1466, %v1599
      %v1612 = vadd.f32 %v1471, %v1599
      %v1613 = vadd.f32 %v1474, %v1599
      %v1614 = vadd.f32 %v1479, %v1599
      %v1615 = vadd.f32 %v1482, %v1599
      %v1616 = vadd.f32 %v1487, %v1599
      %v1617 = vadd.f32 %v1490, %v1599
      %v1618 = vadd.f32 %v1495, %v1599
      %v1619 = vadd.f32 %v1498, %v1599
      %v1620 = vadd.f32 %v1503, %v1599
      %v1621 = vadd.f32 %v1506, %v1599
      %v1622 = vadd.f32 %v1511, %v1603
      %v1623 = vadd.f32 %v1514, %v1603
      %v1624 = vadd.f32 %v1519, %v1603
      %v1625 = vadd.f32 %v1522, %v1603
      %v1626 = vadd.f32 %v1527, %v1603
      %v1627 = vadd.f32 %v1530, %v1603
      %v1628 = vadd.f32 %v1535, %v1603
      %v1629 = vadd.f32 %v1538, %v1603
      %v1630 = vadd.f32 %v1543, %v1603
      %v1631 = vadd.f32 %v1546, %v1603
      %v1632 = vadd.f32 %v1551, %v1603
      %v1633 = vadd.f32 %v1554, %v1603
      %v1634 = vadd.f32 %v1559, %v1603
      %v1635 = vadd.f32 %v1562, %v1603
      %v1636 = vadd.f32 %v1567, %v1603
      %v1637 = vadd.f32 %v1570, %v1603
      %v1638 = vmax.f32 %v1606, 0.0
      %v1639 = vmax.f32 %v1607, 0.0
      %v1640 = vmax.f32 %v1608, 0.0
      %v1641 = vmax.f32 %v1609, 0.0
      %v1642 = vmax.f32 %v1610, 0.0
      %v1643 = vmax.f32 %v1611, 0.0
      %v1644 = vmax.f32 %v1612, 0.0
      %v1645 = vmax.f32 %v1613, 0.0
      %v1646 = vmax.f32 %v1614, 0.0
      %v1647 = vmax.f32 %v1615, 0.0
      %v1648 = vmax.f32 %v1616, 0.0
      %v1649 = vmax.f32 %v1617, 0.0
      %v1650 = vmax.f32 %v1618, 0.0
      %v1651 = vmax.f32 %v1619, 0.0
      %v1652 = vmax.f32 %v1620, 0.0
      %v1653 = vmax.f32 %v1621, 0.0
      %v1654 = vmax.f32 %v1622, 0.0
      %v1655 = vmax.f32 %v1623, 0.0
      %v1656 = vmax.f32 %v1624, 0.0
      %v1657 = vmax.f32 %v1625, 0.0
      %v1658 = vmax.f32 %v1626, 0.0
      %v1659 = vmax.f32 %v1627, 0.0
      %v1660 = vmax.f32 %v1628, 0.0
      %v1661 = vmax.f32 %v1629, 0.0
      %v1662 = vmax.f32 %v1630, 0.0
      %v1663 = vmax.f32 %v1631, 0.0
      %v1664 = vmax.f32 %v1632, 0.0
      %v1665 = vmax.f32 %v1633, 0.0
      %v1666 = vmax.f32 %v1634, 0.0
      %v1667 = vmax.f32 %v1635, 0.0
      %v1668 = vmax.f32 %v1636, 0.0
      %v1669 = vmax.f32 %v1637, 0.0
      %v1670 = vpack.c.bf16 %v1639, %v1638
      %v1671 = vpack.c.bf16 %v1641, %v1640
      %v1672 = vpack.c.bf16 %v1643, %v1642
      %v1673 = vpack.c.bf16 %v1645, %v1644
      %v1674 = vpack.c.bf16 %v1647, %v1646
      %v1675 = vpack.c.bf16 %v1649, %v1648
      %v1676 = vpack.c.bf16 %v1651, %v1650
      %v1677 = vpack.c.bf16 %v1653, %v1652
      %v1678 = vpack.c.bf16 %v1655, %v1654
      %v1679 = vpack.c.bf16 %v1657, %v1656
      %v1680 = vpack.c.bf16 %v1659, %v1658
      %v1681 = vpack.c.bf16 %v1661, %v1660
      %v1682 = vpack.c.bf16 %v1663, %v1662
      %v1683 = vpack.c.bf16 %v1665, %v1664
      %v1684 = vpack.c.bf16 %v1667, %v1666
      %v1685 = vpack.c.bf16 %v1669, %v1668
      %v1686 = vld [vmem:[%s6] sm:$0xf]
      %v1687 = vld [vmem:[%s6 + $0x4] sm:$0xf]
      %v1688 = vld [vmem:[%s6 + $0x8] sm:$0xf]
      %v1689 = vld [vmem:[%s6 + $0xc] sm:$0xf]
      %v1690 = vld [vmem:[%s6 + $0x10] sm:$0xf]
      %v1691 = vld [vmem:[%s6 + $0x14] sm:$0xf]
      %v1692 = vld [vmem:[%s6 + $0x18] sm:$0xf]
      %v1693 = vld [vmem:[%s6 + $0x1c] sm:$0xf]
      %v1694 = vld [vmem:[%s7] sm:$0x1]
      %v1696 = vlaneseq
      %v1697 = vshrl.u32 %v1696, 7
      %v1698 = vsub.s32 0, %v1697
      %v1699 = vrot.slane %v1694, %v1698
      %v1709 = vunpack.c.l.b16 %v1686
      %v1710 = vunpack.c.l.b16 %v1687
      %v1711 = vunpack.c.l.b16 %v1688
      %v1712 = vunpack.c.l.b16 %v1689
      %v1713 = vunpack.c.l.b16 %v1690
      %v1714 = vunpack.c.l.b16 %v1691
      %v1715 = vunpack.c.l.b16 %v1692
      %v1716 = vunpack.c.l.b16 %v1693
      %v1717 = vpack.c.b16 %v1710, %v1709
      %v1718 = vpack.c.b16 %v1712, %v1711
      %v1719 = vpack.c.b16 %v1714, %v1713
      %v1720 = vpack.c.b16 %v1716, %v1715
      %vm1725 = vcmask 523264
      %v1727 = vsel %vm1725, %v1670, 0
      %v1730 = vsel %vm1725, %v1671, 0
      %v1733 = vsel %vm1725, %v1672, 0
      %v1736 = vsel %vm1725, %v1673, 0
      %v1739 = vsel %vm1725, %v1674, 0
      %v1742 = vsel %vm1725, %v1675, 0
      %v1745 = vsel %vm1725, %v1676, 0
      %v1748 = vsel %vm1725, %v1677, 0
      %v1751 = vsel %vm1725, %v1678, 0
      %v1754 = vsel %vm1725, %v1679, 0
      %v1757 = vsel %vm1725, %v1680, 0
      %v1760 = vsel %vm1725, %v1681, 0
      %v1763 = vsel %vm1725, %v1682, 0
      %v1766 = vsel %vm1725, %v1683, 0
      %v1769 = vsel %vm1725, %v1684, 0
      %v1772 = vsel %vm1725, %v1685, 0
      %1774 = vmatprep.subr.bf16.mxu0 0
      %1775 = vmatpush1.bf16.msra.mxu0 %v1717
      %1776 = vmatprep.subr.bf16.mxu0 0
      %1777 = vmatpush1.bf16.msra.mxu0 %v1718
      %1778 = vmatprep.subr.bf16.mxu0 0
      %1779 = vmatpush1.bf16.msra.mxu0 %v1719
      %1780 = vmatprep.subr.bf16.mxu0 0
      %1781 = vmatpush1.bf16.msra.mxu0 %v1720
      %1782 = vmatprep.subr.bf16.mxu0 0
      %1783 = vmatpush1.bf16.msra.mxu0 0
      %1784 = vmatprep.subr.bf16.mxu0 0
      %1785 = vmatpush1.bf16.msra.mxu0 0
      %1786 = vmatprep.subr.bf16.mxu0 0
      %1787 = vmatpush1.bf16.msra.mxu0 0
      %1788 = vmatprep.subr.bf16.mxu0 0
      %1789 = vmatpush1.bf16.msra.mxu0 0
      %1790 = vmatprep.subr.bf16.mxu0 0
      %1791 = vmatpush1.bf16.msra.mxu0 0
      %1792 = vmatprep.subr.bf16.mxu0 0
      %1793 = vmatpush1.bf16.msra.mxu0 0
      %1794 = vmatprep.subr.bf16.mxu0 0
      %1795 = vmatpush1.bf16.msra.mxu0 0
      %1796 = vmatprep.subr.bf16.mxu0 0
      %1797 = vmatpush1.bf16.msra.mxu0 0
      %1798 = vmatprep.subr.bf16.mxu0 0
      %1799 = vmatpush1.bf16.msra.mxu0 0
      %1800 = vmatprep.subr.bf16.mxu0 0
      %1801 = vmatpush1.bf16.msra.mxu0 0
      %1802 = vmatprep.subr.bf16.mxu0 0
      %1803 = vmatpush1.bf16.msra.mxu0 0
      %1804 = vmatprep.subr.bf16.mxu0 0
      %1805 = vmatpush1.bf16.msra.mxu0 0
      %1806 = vmatprep.mubr.bf16.mxu0 0
      %1807 = vmatmul.mubr.bf16.gmra.mrb[0].mxu0 %v1727
      %v1808 = vpop.f32.mrb[0].mxu0
      %v1809 = vadd.f32 %v1699, %v1808
      %v1810 = vpop.f32.mrb[0].mxu0
      %v1811 = vpop.f32.mrb[0].mxu0
      %v1812 = vadd.f32 %v1699, %v1811
      %v1813 = vpop.f32.mrb[0].mxu0
      %1814 = vmatprep.mubr.bf16.mxu0 0
      %1815 = vmatmul.mubr.bf16.gmra.mrb[0].mxu0 %v1730
      %v1816 = vpop.f32.mrb[0].mxu0
      %v1817 = vadd.f32 %v1699, %v1816
      %v1818 = vpop.f32.mrb[0].mxu0
      %v1819 = vpop.f32.mrb[0].mxu0
      %v1820 = vadd.f32 %v1699, %v1819
      %v1821 = vpop.f32.mrb[0].mxu0
      %1822 = vmatprep.mubr.bf16.mxu0 0
      %1823 = vmatmul.mubr.bf16.gmra.mrb[0].mxu0 %v1733
      %v1824 = vpop.f32.mrb[0].mxu0
      %v1825 = vadd.f32 %v1699, %v1824
      %v1826 = vpop.f32.mrb[0].mxu0
      %v1827 = vpop.f32.mrb[0].mxu0
      %v1828 = vadd.f32 %v1699, %v1827
      %v1829 = vpop.f32.mrb[0].mxu0
      %1830 = vmatprep.mubr.bf16.mxu0 0
      %1831 = vmatmul.mubr.bf16.gmra.mrb[0].mxu0 %v1736
      %v1832 = vpop.f32.mrb[0].mxu0
      %v1833 = vadd.f32 %v1699, %v1832
      %v1834 = vpop.f32.mrb[0].mxu0
      %v1835 = vpop.f32.mrb[0].mxu0
      %v1836 = vadd.f32 %v1699, %v1835
      %v1837 = vpop.f32.mrb[0].mxu0
      %1838 = vmatprep.mubr.bf16.mxu0 0
      %1839 = vmatmul.mubr.bf16.gmra.mrb[0].mxu0 %v1739
      %v1840 = vpop.f32.mrb[0].mxu0
      %v1841 = vadd.f32 %v1699, %v1840
      %v1842 = vpop.f32.mrb[0].mxu0
      %v1843 = vpop.f32.mrb[0].mxu0
      %v1844 = vadd.f32 %v1699, %v1843
      %v1845 = vpop.f32.mrb[0].mxu0
      %1846 = vmatprep.mubr.bf16.mxu0 0
      %1847 = vmatmul.mubr.bf16.gmra.mrb[0].mxu0 %v1742
      %v1848 = vpop.f32.mrb[0].mxu0
      %v1849 = vadd.f32 %v1699, %v1848
      %v1850 = vpop.f32.mrb[0].mxu0
      %v1851 = vpop.f32.mrb[0].mxu0
      %v1852 = vadd.f32 %v1699, %v1851
      %v1853 = vpop.f32.mrb[0].mxu0
      %1854 = vmatprep.mubr.bf16.mxu0 0
      %1855 = vmatmul.mubr.bf16.gmra.mrb[0].mxu0 %v1745
      %v1856 = vpop.f32.mrb[0].mxu0
      %v1857 = vadd.f32 %v1699, %v1856
      %v1858 = vpop.f32.mrb[0].mxu0
      %v1859 = vpop.f32.mrb[0].mxu0
      %v1860 = vadd.f32 %v1699, %v1859
      %v1861 = vpop.f32.mrb[0].mxu0
      %1862 = vmatprep.mubr.bf16.mxu0 0
      %1863 = vmatmul.mubr.bf16.gmra.mrb[0].mxu0 %v1748
      %v1864 = vpop.f32.mrb[0].mxu0
      %v1865 = vadd.f32 %v1699, %v1864
      %v1866 = vpop.f32.mrb[0].mxu0
      %v1867 = vpop.f32.mrb[0].mxu0
      %v1868 = vadd.f32 %v1699, %v1867
      %v1869 = vpop.f32.mrb[0].mxu0
      %1870 = vmatprep.mubr.bf16.mxu0 0
      %1871 = vmatmul.mubr.bf16.gmra.mrb[0].mxu0 %v1751
      %v1872 = vpop.f32.mrb[0].mxu0
      %v1873 = vadd.f32 %v1699, %v1872
      %v1874 = vpop.f32.mrb[0].mxu0
      %v1875 = vpop.f32.mrb[0].mxu0
      %v1876 = vadd.f32 %v1699, %v1875
      %v1877 = vpop.f32.mrb[0].mxu0
      %1878 = vmatprep.mubr.bf16.mxu0 0
      %1879 = vmatmul.mubr.bf16.gmra.mrb[0].mxu0 %v1754
      %v1880 = vpop.f32.mrb[0].mxu0
      %v1881 = vadd.f32 %v1699, %v1880
      %v1882 = vpop.f32.mrb[0].mxu0
      %v1883 = vpop.f32.mrb[0].mxu0
      %v1884 = vadd.f32 %v1699, %v1883
      %v1885 = vpop.f32.mrb[0].mxu0
      %1886 = vmatprep.mubr.bf16.mxu0 0
      %1887 = vmatmul.mubr.bf16.gmra.mrb[0].mxu0 %v1757
      %v1888 = vpop.f32.mrb[0].mxu0
      %v1889 = vadd.f32 %v1699, %v1888
      %v1890 = vpop.f32.mrb[0].mxu0
      %v1891 = vpop.f32.mrb[0].mxu0
      %v1892 = vadd.f32 %v1699, %v1891
      %v1893 = vpop.f32.mrb[0].mxu0
      %1894 = vmatprep.mubr.bf16.mxu0 0
      %1895 = vmatmul.mubr.bf16.gmra.mrb[0].mxu0 %v1760
      %v1896 = vpop.f32.mrb[0].mxu0
      %v1897 = vadd.f32 %v1699, %v1896
      %v1898 = vpop.f32.mrb[0].mxu0
      %v1899 = vpop.f32.mrb[0].mxu0
      %v1900 = vadd.f32 %v1699, %v1899
      %v1901 = vpop.f32.mrb[0].mxu0
      %1902 = vmatprep.mubr.bf16.mxu0 0
      %1903 = vmatmul.mubr.bf16.gmra.mrb[0].mxu0 %v1763
      %v1904 = vpop.f32.mrb[0].mxu0
      %v1905 = vadd.f32 %v1699, %v1904
      %v1906 = vpop.f32.mrb[0].mxu0
      %v1907 = vpop.f32.mrb[0].mxu0
      %v1908 = vadd.f32 %v1699, %v1907
      %v1909 = vpop.f32.mrb[0].mxu0
      %1910 = vmatprep.mubr.bf16.mxu0 0
      %1911 = vmatmul.mubr.bf16.gmra.mrb[0].mxu0 %v1766
      %v1912 = vpop.f32.mrb[0].mxu0
      %v1913 = vadd.f32 %v1699, %v1912
      %v1914 = vpop.f32.mrb[0].mxu0
      %v1915 = vpop.f32.mrb[0].mxu0
      %v1916 = vadd.f32 %v1699, %v1915
      %v1917 = vpop.f32.mrb[0].mxu0
      %1918 = vmatprep.mubr.bf16.mxu0 0
      %1919 = vmatmul.mubr.bf16.gmra.mrb[0].mxu0 %v1769
      %v1920 = vpop.f32.mrb[0].mxu0
      %v1921 = vadd.f32 %v1699, %v1920
      %v1922 = vpop.f32.mrb[0].mxu0
      %v1923 = vpop.f32.mrb[0].mxu0
      %v1924 = vadd.f32 %v1699, %v1923
      %v1925 = vpop.f32.mrb[0].mxu0
      %1926 = vmatprep.mubr.bf16.mxu0 0
      %1927 = vmatmul.mubr.bf16.gmra.mrb[0].mxu0 %v1772
      %v1928 = vpop.f32.mrb[0].mxu0
      %v1929 = vadd.f32 %v1699, %v1928
      %v1930 = vpop.f32.mrb[0].mxu0
      %v1931 = vpop.f32.mrb[0].mxu0
      %v1932 = vadd.f32 %v1699, %v1931
      %v1933 = vpop.f32.mrb[0].mxu0
      %1934 = vdwg.mxu0
      %vm1935 = vcmask 130048
      %1936 = vst.msk [vmem:[%s307] sm:$0xff] %vm1935, %v1809
      %1937 = vst.msk [vmem:[%s307 + $0x8] sm:$0xff] %vm1935, %v1812
      %1938 = vst.msk [vmem:[%s307 + $0x10] sm:$0xff] %vm1935, %v1817
      %1939 = vst.msk [vmem:[%s307 + $0x18] sm:$0xff] %vm1935, %v1820
      %1940 = vst.msk [vmem:[%s307 + $0x20] sm:$0xff] %vm1935, %v1825
      %1941 = vst.msk [vmem:[%s307 + $0x28] sm:$0xff] %vm1935, %v1828
      %1942 = vst.msk [vmem:[%s307 + $0x30] sm:$0xff] %vm1935, %v1833
      %1943 = vst.msk [vmem:[%s307 + $0x38] sm:$0xff] %vm1935, %v1836
      %1944 = vst.msk [vmem:[%s307 + $0x40] sm:$0xff] %vm1935, %v1841
      %1945 = vst.msk [vmem:[%s307 + $0x48] sm:$0xff] %vm1935, %v1844
      %1946 = vst.msk [vmem:[%s307 + $0x50] sm:$0xff] %vm1935, %v1849
      %1947 = vst.msk [vmem:[%s307 + $0x58] sm:$0xff] %vm1935, %v1852
      %1948 = vst.msk [vmem:[%s307 + $0x60] sm:$0xff] %vm1935, %v1857
      %1949 = vst.msk [vmem:[%s307 + $0x68] sm:$0xff] %vm1935, %v1860
      %1950 = vst.msk [vmem:[%s307 + $0x70] sm:$0xff] %vm1935, %v1865
      %1951 = vst.msk [vmem:[%s307 + $0x78] sm:$0xff] %vm1935, %v1868
      %1952 = vst.msk [vmem:[%s307 + $0x80] sm:$0xff] %vm1935, %v1873
      %1953 = vst.msk [vmem:[%s307 + $0x88] sm:$0xff] %vm1935, %v1876
      %1954 = vst.msk [vmem:[%s307 + $0x90] sm:$0xff] %vm1935, %v1881
      %1955 = vst.msk [vmem:[%s307 + $0x98] sm:$0xff] %vm1935, %v1884
      %1956 = vst.msk [vmem:[%s307 + $0xa0] sm:$0xff] %vm1935, %v1889
      %1957 = vst.msk [vmem:[%s307 + $0xa8] sm:$0xff] %vm1935, %v1892
      %1958 = vst.msk [vmem:[%s307 + $0xb0] sm:$0xff] %vm1935, %v1897
      %1959 = vst.msk [vmem:[%s307 + $0xb8] sm:$0xff] %vm1935, %v1900
      %1960 = vst.msk [vmem:[%s307 + $0xc0] sm:$0xff] %vm1935, %v1905
      %1961 = vst.msk [vmem:[%s307 + $0xc8] sm:$0xff] %vm1935, %v1908
      %1962 = vst.msk [vmem:[%s307 + $0xd0] sm:$0xff] %vm1935, %v1913
      %1963 = vst.msk [vmem:[%s307 + $0xd8] sm:$0xff] %vm1935, %v1916
      %1964 = vst.msk [vmem:[%s307 + $0xe0] sm:$0xff] %vm1935, %v1921
      %1965 = vst.msk [vmem:[%s307 + $0xe8] sm:$0xff] %vm1935, %v1924
      %1966 = vst.msk [vmem:[%s307 + $0xf0] sm:$0xff] %vm1935, %v1929
      %1967 = vst.msk [vmem:[%s307 + $0xf8] sm:$0xff] %vm1935, %v1932
      %s1968 = smul.u32 32, %s19
      %p1969 = scmp.lt.s32.totalorder %s1968, 255
      %s1970 = scalar_select %p1969, %s1968, 255
      %s1971 = smul.addr %s1970, 8
      %s1972 = scalar_lea.vmem %s8, %s1971
      // Predicated region
      $region53: #{pointnet_xs_forward.1} parent=51 // pred_check
        %p1973 = pneg %p210
      $region54: #{pointnet_xs_forward.1} parent=51 // pred_check_branch
        %1975 = sbr.rel (%p1973) target = $region56
      $region55: #{pointnet_xs_forward.1} parent=51 // pred_region
        %s1976 = smul.u32 32, %s19
      $region56: #{pointnet_xs_forward.1} parent=51 // pred_fallthru
        _
    $region52: #{pointnet_xs_forward.1} parent=5 // pred_fallthru
      _
    %p1977 = scmp.le.s32.totalorder 2, %s14
    // Predicated region
    $region57: #{pointnet_xs_forward.1} parent=5 // pred_check
      %p1978 = pneg %p1977
    $region58: #{pointnet_xs_forward.1} parent=5 // pred_check_branch
      %1980 = sbr.rel (%p1978) target = $region60
    $region59: #{pointnet_xs_forward.1} parent=5 // pred_region
      %s1981 = ssub.s32 %s14, 2
      // Predicated region
      $region61: #{pointnet_xs_forward.1} parent=59 // pred_check
        %p1982 = pneg %p216
      $region62: #{pointnet_xs_forward.1} parent=59 // pred_check_branch
        %1984 = sbr.rel (%p1982) target = $region64
      $region63: #{pointnet_xs_forward.1} parent=59 // pred_region
        %s1985 = smul.u32 32, %s20
        %p1986 = scmp.lt.s32.totalorder %s1985, 255
        %s1987 = scalar_select %p1986, %s1985, 255
        %s1988 = smul.addr %s1987, 8
        %s1989 = scalar_lea.vmem %s8, %s1988
      $region64: #{pointnet_xs_forward.1} parent=59 // pred_fallthru
        _
    $region60: #{pointnet_xs_forward.1} parent=5 // pred_fallthru
      _
  $region6: #{pointnet_xs_forward.1} parent=0 // loop_footer
    %s18 = sadd.s32 1, %s14
  $region7: #{pointnet_xs_forward.1} parent=0 // loop_footer_branch
    %13 = sbr.rel target = $region3
  $region8: #{pointnet_xs_forward.1} parent=0 // loop_exit
    _

</llo_original>
